<compile_context>
chip_gen: v7x
topology: tpu7x:2x2x1
jax: 0.10.0
libtpu: 0.0.40
codegen_flags: <defaults>
</compile_context>

<pallas_src>
import functools

import jax
import jax.numpy as jnp
from jax import lax
from jax.experimental import pallas as pl
from jax.experimental.pallas import tpu as pltpu

EPS = 1e-5
LANE = 128


def _bn_conv_relu_kernel(x_ref, w_ref, bias_ref, o_ref, *,
                         kh, kw, stride, OH, OW, C_in, K, K_pad, NB,
                         relu, use_bf16):
    """Fused: register im2col -> lane-dense MXU matmul -> +bias -> ReLU.

    x_ref    : (NB, Hp, Wp, C_in)      raw NHWC input, spatially zero-padded
    w_ref    : (K_pad, C_out_pad)      conv weights with BN scale a[c] folded in
    bias_ref : (OH*OW, C_out_pad)      per-output-position BN-shift bias map
    o_ref    : (NB, OH*OW, C_out_pad)
    """
    x = x_ref[...]                                            # (NB, Hp, Wp, C_in) f32

    # Register im2col: static slices, concatenated along the lane dim, padded to 128.
    taps = []
    for i in range(kh):
        for j in range(kw):
            taps.append(x[:, i:i + (OH - 1) * stride + 1:stride,
                            j:j + (OW - 1) * stride + 1:stride, :])  # (NB, OH, OW, C_in)
    if K_pad > K:
        taps.append(jnp.zeros((NB, OH, OW, K_pad - K), x.dtype))
    patches = jnp.concatenate(taps, axis=-1).reshape(NB * OH * OW, K_pad)

    if use_bf16:
        patches = patches.astype(jnp.bfloat16)                 # bf16 operands, f32 acc
        acc = jnp.dot(patches, w_ref[...], preferred_element_type=jnp.float32)
    else:
        acc = jnp.dot(patches, w_ref[...], preferred_element_type=jnp.float32,
                      precision=lax.Precision.HIGHEST)

    acc = acc.reshape(NB, OH * OW, acc.shape[-1]) + bias_ref[...][None]
    if relu:
        acc = jnp.maximum(acc, 0.0)
    o_ref[...] = acc.astype(o_ref.dtype)


def bn_conv_relu(x_nchw, gamma, beta, weight, *, stride, padding,
                 relu=True, use_bf16=True, out_dtype=jnp.float32):
    """Forward of BNConvReLU (training-mode BN batch stats, biased var, eps=1e-5)."""
    x_nchw = x_nchw.astype(jnp.float32)
    N, C_in, H, W = x_nchw.shape
    C_out, C_in_w, kh, kw = weight.shape
    assert C_in_w == C_in
    weight = weight.astype(jnp.float32)

    # --- BatchNorm2d batch statistics (tiny per-channel reduction, left in XLA),
    #     expressed as xn = a*x + b.
    x_nhwc = jnp.transpose(x_nchw, (0, 2, 3, 1))               # NHWC
    mean = jnp.mean(x_nhwc, axis=(0, 1, 2))
    var = jnp.mean(jnp.square(x_nhwc - mean), axis=(0, 1, 2))  # biased (PyTorch norm)
    a = gamma.astype(jnp.float32) * lax.rsqrt(var + EPS)       # (C_in,)
    b = beta.astype(jnp.float32) - mean * a                    # (C_in,)

    OH = (H + 2 * padding - kh) // stride + 1
    OW = (W + 2 * padding - kw) // stride + 1
    K = kh * kw * C_in
    K_pad = ((K + LANE - 1) // LANE) * LANE
    C_out_pad = ((C_out + LANE - 1) // LANE) * LANE

    # --- BN folded out of the kernel:
    #   conv(pad(a*x + b*valid), w) = conv(pad(x), w*a) + conv(valid, sum_c b[c]*w)
    # 1) weights with a[c] folded in: (C_out,C_in,kh,kw) -> (kh*kw*C_in, C_out), padded
    #    to 128-multiples (unmasked vld/vst, full MXU contraction).
    wmat = jnp.transpose(weight * a.reshape(1, C_in, 1, 1),
                         (2, 3, 1, 0)).reshape(K, C_out)
    wmat = jnp.pad(wmat, ((0, K_pad - K), (0, C_out_pad - C_out)))
    if use_bf16:
        wmat = wmat.astype(jnp.bfloat16)

    # 2) per-output-position bias map: accounts for the BN shift b and the fact that
    #    padded pixels are zeros of the *normalized* input (BN-then-pad order).
    valid = jnp.pad(jnp.ones((1, 1, H, W), jnp.float32),
                    ((0, 0), (0, 0), (padding, padding), (padding, padding)))
    wb = jnp.einsum('c,ocij->oij', b, weight)[:, None]         # (C_out, 1, kh, kw)
    bias = lax.conv_general_dilated(valid, wb, window_strides=(stride, stride),
                                    padding='VALID',
                                    dimension_numbers=("NCHW", "OIHW", "NCHW"))
    bias = jnp.transpose(bias[0], (1, 2, 0)).reshape(OH * OW, C_out)
    bias = jnp.pad(bias, ((0, 0), (0, C_out_pad - C_out)))

    # --- spatial zero-pad of the raw input.
    # TODO(synk): for large H*W avoid materializing this padded copy in HBM (handle
    # the halo in-kernel via memory_space=pl.ANY + pltpu.make_async_copy) and
    # pre-interleave to a lane-dense (N, Hp, Wp*C_in) layout so small C_in does not
    # cost ~32x lane padding in VMEM/DMA (most important on v7x's 64 MiB VMEM).
    xp = jnp.pad(x_nhwc, ((0, 0), (padding, padding), (padding, padding), (0, 0)))
    Hp, Wp = H + 2 * padding, W + 2 * padding

    # --- batch-block size: target ~512 matmul rows per grid step (amortize ~0.35us
    # per-step overhead on single-TC v5e/v6e) but keep >= 2 grid steps when N >= 2
    # so both v7x TensorCores get work and BlockSpec double-buffering overlaps DMA.
    OHW = OH * OW
    nb = max(1, min(N, max(1, 512 // max(OHW, 1))))
    while nb > 1 and N // nb < 2:
        nb -= 1
    while N % nb:
        nb -= 1

    kern = functools.partial(
        _bn_conv_relu_kernel, kh=kh, kw=kw, stride=stride, OH=OH, OW=OW,
        C_in=C_in, K=K, K_pad=K_pad, NB=nb, relu=relu, use_bf16=use_bf16)

    out = pl.pallas_call(
        kern,
        out_shape=jax.ShapeDtypeStruct((N, OHW, C_out_pad), out_dtype),
        grid=(N // nb,),
        in_specs=[
            pl.BlockSpec((nb, Hp, Wp, C_in), lambda n: (n, 0, 0, 0)),
            pl.BlockSpec((K_pad, C_out_pad), lambda n: (0, 0)),
            pl.BlockSpec((OHW, C_out_pad), lambda n: (0, 0)),
        ],
        out_specs=pl.BlockSpec((nb, OHW, C_out_pad), lambda n: (n, 0, 0)),
        compiler_params=pltpu.CompilerParams(dimension_semantics=("parallel",)),
    )(xp, wmat, bias)

    # TODO(synk): if the consumer accepts NHWC (and bf16 via out_dtype=jnp.bfloat16),
    # skip this slice + transpose relayout pass and halve the HBM writeback.
    out = out[:, :, :C_out].astype(jnp.float32).reshape(N, OH, OW, C_out)
    return jnp.transpose(out, (0, 3, 1, 2))                    # back to NCHW


def reference(x_nchw, gamma, beta, weight, *, stride, padding, relu=True):
    """Pure-JAX f32 reference matching PyTorch training-mode BNConvReLU."""
    x = x_nchw.astype(jnp.float32)
    mean = jnp.mean(x, axis=(0, 2, 3), keepdims=True)
    var = jnp.mean(jnp.square(x - mean), axis=(0, 2, 3), keepdims=True)
    xn = (x - mean) * lax.rsqrt(var + EPS)
    xn = xn * gamma.reshape(1, -1, 1, 1) + beta.reshape(1, -1, 1, 1)
    y = lax.conv_general_dilated(
        xn, weight.astype(jnp.float32),
        window_strides=(stride, stride),
        padding=[(padding, padding), (padding, padding)],
        dimension_numbers=("NCHW", "OIHW", "NCHW"),
        precision=lax.Precision.HIGHEST)
    return jnp.maximum(y, 0.0) if relu else y


if __name__ == "__main__":
    # BNConvReLU(C_in=4, C_out=8, kernel_size=3, stride=1, padding=1)
    N, C_in, H, W = 2, 4, 16, 16
    C_out, ksize, stride, padding = 8, 3, 1, 1

    key = jax.random.PRNGKey(0)
    kx, kg, kb, kwt = jax.random.split(key, 4)
    x = jax.random.normal(kx, (N, C_in, H, W), dtype=jnp.float32)
    gamma = 1.0 + 0.1 * jax.random.normal(kg, (C_in,), dtype=jnp.float32)   # BN weight
    beta = 0.1 * jax.random.normal(kb, (C_in,), dtype=jnp.float32)          # BN bias
    weight = jax.random.normal(kwt, (C_out, C_in, ksize, ksize), dtype=jnp.float32) * 0.1

    ref = reference(x, gamma, beta, weight, stride=stride, padding=padding, relu=True)

    # Default perf path: bf16 MXU operands, f32 accumulation, f32 output.
    out = bn_conv_relu(x, gamma, beta, weight, stride=stride, padding=padding,
                       relu=True, use_bf16=True)
    out = jax.block_until_ready(out)
    assert out.shape == (N, C_out, H, W)
    # Tolerance reflects bf16 operand rounding (accumulation stays f32).
    assert jnp.max(jnp.abs(out - ref)) < 3e-2, "bf16 path mismatch vs reference"

    # Same kernel with full-f32 operands (explicit HIGHEST precision) as a sanity check.
    out32 = bn_conv_relu(x, gamma, beta, weight, stride=stride, padding=padding,
                         relu=True, use_bf16=False)
    out32 = jax.block_until_ready(out32)
    assert jnp.max(jnp.abs(out32 - ref)) < 1e-3, "f32 path mismatch vs reference"

    print("KERNEL_OK")
</pallas_src>

<mosaic_0001>
module attributes {stable_mosaic.version = 11 : i64} {
  func.func @_bn_conv_relu_kernel(%arg0: i32, %arg1: memref<1x18x18x4xf32, #tpu.memory_space<vmem>>, %arg2: memref<128x128xbf16, #tpu.memory_space<vmem>>, %arg3: memref<256x128xf32, #tpu.memory_space<vmem>>, %arg4: memref<1x256x128xf32, #tpu.memory_space<vmem>>) attributes {dimension_semantics = [#tpu.dimension_semantics<parallel>], iteration_bounds = array<i64: 2>, scalar_prefetch = 0 : i64, scratch_operands = 0 : i64, tpu.core_type = #tpu.core_type<tc>, window_params = [{transform_indices = @transform_0, window_bounds = array<i64: 1, 18, 18, 4>}, {pipeline_mode = #tpu.pipeline_mode<synchronous>, transform_indices = @transform_1, window_bounds = array<i64: 128, 128>}, {pipeline_mode = #tpu.pipeline_mode<synchronous>, transform_indices = @transform_2, window_bounds = array<i64: 256, 128>}, {transform_indices = @transform_3, window_bounds = array<i64: 1, 256, 128>}]} {
    %c0 = arith.constant 0 : index
    %c0_0 = arith.constant 0 : index
    %c0_1 = arith.constant 0 : index
    %c0_2 = arith.constant 0 : index
    %0 = vector.load %arg1[%c0, %c0_0, %c0_1, %c0_2] : memref<1x18x18x4xf32, #tpu.memory_space<vmem>>, vector<1x18x18x4xf32>
    %1 = vector.extract_strided_slice %0 {offsets = [0, 0, 0, 0], sizes = [1, 16, 16, 4], strides = [1, 1, 1, 1]} : vector<1x18x18x4xf32> to vector<1x16x16x4xf32>
    %2 = vector.extract_strided_slice %0 {offsets = [0, 0, 1, 0], sizes = [1, 16, 16, 4], strides = [1, 1, 1, 1]} : vector<1x18x18x4xf32> to vector<1x16x16x4xf32>
    %3 = vector.extract_strided_slice %0 {offsets = [0, 0, 2, 0], sizes = [1, 16, 16, 4], strides = [1, 1, 1, 1]} : vector<1x18x18x4xf32> to vector<1x16x16x4xf32>
    %4 = vector.extract_strided_slice %0 {offsets = [0, 1, 0, 0], sizes = [1, 16, 16, 4], strides = [1, 1, 1, 1]} : vector<1x18x18x4xf32> to vector<1x16x16x4xf32>
    %5 = vector.extract_strided_slice %0 {offsets = [0, 1, 1, 0], sizes = [1, 16, 16, 4], strides = [1, 1, 1, 1]} : vector<1x18x18x4xf32> to vector<1x16x16x4xf32>
    %6 = vector.extract_strided_slice %0 {offsets = [0, 1, 2, 0], sizes = [1, 16, 16, 4], strides = [1, 1, 1, 1]} : vector<1x18x18x4xf32> to vector<1x16x16x4xf32>
    %7 = vector.extract_strided_slice %0 {offsets = [0, 2, 0, 0], sizes = [1, 16, 16, 4], strides = [1, 1, 1, 1]} : vector<1x18x18x4xf32> to vector<1x16x16x4xf32>
    %8 = vector.extract_strided_slice %0 {offsets = [0, 2, 1, 0], sizes = [1, 16, 16, 4], strides = [1, 1, 1, 1]} : vector<1x18x18x4xf32> to vector<1x16x16x4xf32>
    %9 = vector.extract_strided_slice %0 {offsets = [0, 2, 2, 0], sizes = [1, 16, 16, 4], strides = [1, 1, 1, 1]} : vector<1x18x18x4xf32> to vector<1x16x16x4xf32>
    %cst = arith.constant 0.000000e+00 : f32
    %10 = vector.broadcast %cst : f32 to vector<1x16x16x92xf32>
    %11 = tpu.concatenate %1, %2, %3, %4, %5, %6, %7, %8, %9, %10 in 3 : vector<1x16x16x4xf32>, vector<1x16x16x4xf32>, vector<1x16x16x4xf32>, vector<1x16x16x4xf32>, vector<1x16x16x4xf32>, vector<1x16x16x4xf32>, vector<1x16x16x4xf32>, vector<1x16x16x4xf32>, vector<1x16x16x4xf32>, vector<1x16x16x92xf32> -> vector<1x16x16x128xf32>
    %12 = vector.shape_cast %11 : vector<1x16x16x128xf32> to vector<256x128xf32>
    %13 = arith.truncf %12 : vector<256x128xf32> to vector<256x128xbf16>
    %c0_3 = arith.constant 0 : index
    %c0_4 = arith.constant 0 : index
    %14 = vector.load %arg2[%c0_3, %c0_4] : memref<128x128xbf16, #tpu.memory_space<vmem>>, vector<128x128xbf16>
    %cst_5 = arith.constant dense<0.000000e+00> : vector<256x128xf32>
    %15 = tpu.matmul %13, %14, %cst_5 {dimension_numbers = #tpu.dot_dimension_numbers<[1], [0], [0], [1], [0, 0, 1, 1], [], []>} : vector<256x128xbf16>, vector<128x128xbf16>, vector<256x128xf32> -> vector<256x128xf32>
    %16 = vector.shape_cast %15 : vector<256x128xf32> to vector<1x256x128xf32>
    %c0_6 = arith.constant 0 : index
    %c0_7 = arith.constant 0 : index
    %17 = vector.load %arg3[%c0_6, %c0_7] : memref<256x128xf32, #tpu.memory_space<vmem>>, vector<256x128xf32>
    %18 = vector.shape_cast %17 : vector<256x128xf32> to vector<1x256x128xf32>
    %19 = arith.addf %16, %18 : vector<1x256x128xf32>
    %cst_8 = arith.constant 0.000000e+00 : f32
    %20 = vector.broadcast %cst_8 : f32 to vector<1x256x128xf32>
    %21 = arith.maximumf %19, %20 : vector<1x256x128xf32>
    %c0_9 = arith.constant 0 : index
    %c0_10 = arith.constant 0 : index
    %c0_11 = arith.constant 0 : index
    %22 = vector.load %arg4[%c0_9, %c0_10, %c0_11] : memref<1x256x128xf32, #tpu.memory_space<vmem>>, vector<1x256x128xf32>
    tpu.vector_store %arg4[%c0_9, %c0_10, %c0_11], %21 {strides = array<i32>} : memref<1x256x128xf32, #tpu.memory_space<vmem>>, vector<1x256x128xf32>,
    return
  }
  func.func @transform_0(%arg0: i32) -> (i32, i32, i32, i32) {
    %c0_i32 = arith.constant 0 : i32
    %c0_i32_0 = arith.constant 0 : i32
    %c0_i32_1 = arith.constant 0 : i32
    %c0_i32_2 = arith.constant 0 : i32
    return %arg0, %c0_i32, %c0_i32_0, %c0_i32_1 : i32, i32, i32, i32
  }
  func.func @transform_1(%arg0: i32) -> (i32, i32) {
    %c0_i32 = arith.constant 0 : i32
    %c0_i32_0 = arith.constant 0 : i32
    %c0_i32_1 = arith.constant 0 : i32
    return %c0_i32, %c0_i32_0 : i32, i32
  }
  func.func @transform_2(%arg0: i32) -> (i32, i32) {
    %c0_i32 = arith.constant 0 : i32
    %c0_i32_0 = arith.constant 0 : i32
    %c0_i32_1 = arith.constant 0 : i32
    return %c0_i32, %c0_i32_0 : i32, i32
  }
  func.func @transform_3(%arg0: i32) -> (i32, i32, i32) {
    %c0_i32 = arith.constant 0 : i32
    %c0_i32_0 = arith.constant 0 : i32
    %c0_i32_1 = arith.constant 0 : i32
    return %arg0, %c0_i32, %c0_i32_0 : i32, i32, i32
  }
}

</mosaic_0001>

<llo_original>
// kernel: tpu_custom_call.1
$region0: #{tpu_custom_call.1}
  #allocation0 [shape = 'u32[]', space=smem, size = 0x4, offset = 0x4, fixed_abs, tag = 'smem constant byte address 0x4 - core index']
  #allocation1 [shape = 'u32[144,128]{1,0:T(1,128)}', space=vmem, size = 0x12000, scoped, tag = 'internal scratch']
  %s0 = inlined_call_operand.vmem [shape: f32[2,18,18,4], index: 0, kind: input, shape index: {}]
  %s1 = inlined_call_operand.vmem [shape: bf16[128,128], index: 1, kind: input, shape index: {}]
  %s2 = inlined_call_operand.vmem [shape: f32[256,128], index: 2, kind: input, shape index: {}]
  %s3 = inlined_call_operand.hbm [shape: f32[2,256,128], index: 3, kind: output, shape index: {}]
  %s4 = sld [smem:[#allocation0]]
  $region45: #{tpu_custom_call.1} parent=0
    _
  %s6 = ssub.s32 1, %s4
  %s7 = scalar_select 0, %s6, %s4
  $region1: #{tpu_custom_call.1} parent=0
    #allocation2 [shape = 'u8[262144]{0}', space=vmem, size = 0x40000, scoped, tag = 'output window, operand 0']
    #allocation3 [shape = 's32[2]{0}', space=sflag, size = 0x8, scoped, tag = 'scoped memory for tpu_custom_call.1']
    %8 = vsyncpa [#allocation3], 0
    %s9 = scalar_lea.sflag [#allocation3], 1
    %10 = vsyncpa %s9, 0
    loop: start=0, step=1, limit=4
    $region2: #{tpu_custom_call.1} parent=1 // loop_pre_header
      _
    $region3: #{tpu_custom_call.1} parent=1 // loop_header
      %s12 = sphi 0, %s16
      %p13 = scmp.ge.s32.totalorder %s12, 4
      %s22 = sphi 0, %s24
      %s25 = sphi 0, %s22
      %s26 = sphi 0, %s25
      %s42 = sphi 0, %s26
      %s46 = sphi 0, %s46
      %s48 = sphi 0, %s46
      %s49 = sphi 0, %s48
      %s63 = sphi 0, %s49
      %s67 = sphi 0, %s67
      %s69 = sphi 0, %s67
      %s70 = sphi 0, %s69
      %s84 = sphi 0, %s70
      %s90 = sphi 0, %s92
      %s93 = sphi 0, %s90
      %s94 = sphi 0, %s93
      %s110 = sphi 0, %s94
    $region4: #{tpu_custom_call.1} parent=1 // loop_header_branch
      %15 = sbr.rel (%p13) target = $region8
    $region5: #{tpu_custom_call.1} parent=1 // loop_body
      %s17 = ssub.s32 %s12, 1
      %s18 = ssub.s32 %s12, 2
      %s19 = sadd.s32 %s12, 1
      %s20 = ssub.s32 %s12, %s19
      %p21 = scmp.eq.s32.totalorder %s20, 0
      %s23 = sadd.s32 %s22, 1
      %s24 = scalar_select %p21, %s22, %s23
      %p27 = pneg %p21
      %p28 = scmp.eq.s32.totalorder %s12, 1
      %p29 = por %p27, %p28
      %p30 = scmp.ne.s32.totalorder %s22, %s25
      %p31 = scmp.eq.s32.totalorder %s12, 0
      %p32 = por %p30, %p31
      %p33 = scmp.ne.s32.totalorder %s22, %s25
      %p34 = scmp.eq.s32.totalorder %s17, 1
      %p35 = por %p33, %p34
      %p36 = scmp.ne.s32.totalorder %s25, %s26
      %p37 = scmp.eq.s32.totalorder %s17, 0
      %p38 = por %p36, %p37
      %p39 = scmp.ne.s32.totalorder %s25, %s26
      %p40 = scmp.eq.s32.totalorder %s18, 1
      %p41 = por %p39, %p40
      %p43 = scmp.ne.s32.totalorder %s26, %s42
      %p44 = scmp.eq.s32.totalorder %s18, 0
      %p45 = por %p43, %p44
      %s47 = sadd.s32 %s46, 1
      %p50 = scmp.eq.s32.totalorder %s12, 1
      %p51 = scmp.ne.s32.totalorder %s46, %s48
      %p52 = scmp.eq.s32.totalorder %s12, 0
      %p53 = por %p51, %p52
      %p54 = scmp.ne.s32.totalorder %s46, %s48
      %p55 = scmp.eq.s32.totalorder %s17, 1
      %p56 = por %p54, %p55
      %p57 = scmp.ne.s32.totalorder %s48, %s49
      %p58 = scmp.eq.s32.totalorder %s17, 0
      %p59 = por %p57, %p58
      %p60 = scmp.ne.s32.totalorder %s48, %s49
      %p61 = scmp.eq.s32.totalorder %s18, 1
      %p62 = por %p60, %p61
      %p64 = scmp.ne.s32.totalorder %s49, %s63
      %p65 = scmp.eq.s32.totalorder %s18, 0
      %p66 = por %p64, %p65
      %s68 = sadd.s32 %s67, 1
      %p71 = scmp.eq.s32.totalorder %s12, 1
      %p72 = scmp.ne.s32.totalorder %s67, %s69
      %p73 = scmp.eq.s32.totalorder %s12, 0
      %p74 = por %p72, %p73
      %p75 = scmp.ne.s32.totalorder %s67, %s69
      %p76 = scmp.eq.s32.totalorder %s17, 1
      %p77 = por %p75, %p76
      %p78 = scmp.ne.s32.totalorder %s69, %s70
      %p79 = scmp.eq.s32.totalorder %s17, 0
      %p80 = por %p78, %p79
      %p81 = scmp.ne.s32.totalorder %s69, %s70
      %p82 = scmp.eq.s32.totalorder %s18, 1
      %p83 = por %p81, %p82
      %p85 = scmp.ne.s32.totalorder %s70, %s84
      %p86 = scmp.eq.s32.totalorder %s18, 0
      %p87 = por %p85, %p86
      %s88 = ssub.s32 %s12, %s19
      %p89 = scmp.eq.s32.totalorder %s88, 0
      %s91 = sadd.s32 %s90, 1
      %s92 = scalar_select %p89, %s90, %s91
      %p95 = pneg %p89
      %p96 = scmp.eq.s32.totalorder %s12, 1
      %p97 = por %p95, %p96
      %p98 = scmp.ne.s32.totalorder %s90, %s93
      %p99 = scmp.eq.s32.totalorder %s12, 0
      %p100 = por %p98, %p99
      %p101 = scmp.ne.s32.totalorder %s90, %s93
      %p102 = scmp.eq.s32.totalorder %s17, 1
      %p103 = por %p101, %p102
      %p104 = scmp.ne.s32.totalorder %s93, %s94
      %p105 = scmp.eq.s32.totalorder %s17, 0
      %p106 = por %p104, %p105
      %p107 = scmp.ne.s32.totalorder %s93, %s94
      %p108 = scmp.eq.s32.totalorder %s18, 1
      %p109 = por %p107, %p108
      %p111 = scmp.ne.s32.totalorder %s94, %s110
      %p112 = scmp.eq.s32.totalorder %s18, 0
      %p113 = por %p111, %p112
      %p114 = scmp.le.s32.totalorder 1, %s12
      %p115 = scmp.lt.s32.totalorder %s12, 3
      %p116 = pnand %p114, %p115
      %p117 = pneg %p116
      // Predicated region
      $region9: #{tpu_custom_call.1} parent=5 // pred_check
        _
      $region10: #{tpu_custom_call.1} parent=5 // pred_check_branch
        %119 = sbr.rel (%p116) target = $region12
      $region11: #{tpu_custom_call.1} parent=5 // pred_region
        %s120 = ssub.s32 %s12, 1
        // Predicated region
        $region13: #{tpu_custom_call.1} parent=11 // pred_check
          %p121 = pneg %p59
        $region14: #{tpu_custom_call.1} parent=11 // pred_check_branch
          %123 = sbr.rel (%p121) target = $region16
        $region15: #{tpu_custom_call.1} parent=11 // pred_region
          _
        $region16: #{tpu_custom_call.1} parent=11 // pred_fallthru
          _
        // Predicated region
        $region17: #{tpu_custom_call.1} parent=11 // pred_check
          %p124 = pneg %p80
        $region18: #{tpu_custom_call.1} parent=11 // pred_check_branch
          %126 = sbr.rel (%p124) target = $region20
        $region19: #{tpu_custom_call.1} parent=11 // pred_region
          _
        $region20: #{tpu_custom_call.1} parent=11 // pred_fallthru
          _
      $region12: #{tpu_custom_call.1} parent=5 // pred_fallthru
        _
      %p127 = scmp.lt.s32.totalorder %s12, 2
      // Predicated region
      $region21: #{tpu_custom_call.1} parent=5 // pred_check
        %p128 = pneg %p127
      $region22: #{tpu_custom_call.1} parent=5 // pred_check_branch
        %130 = sbr.rel (%p128) target = $region24
      $region23: #{tpu_custom_call.1} parent=5 // pred_region
        // Predicated region
        $region25: #{tpu_custom_call.1} parent=23 // pred_check
          %p131 = pneg %p32
        $region26: #{tpu_custom_call.1} parent=23 // pred_check_branch
          %133 = sbr.rel (%p131) target = $region28
        $region27: #{tpu_custom_call.1} parent=23 // pred_region
          %p134 = scmp.lt.s32.totalorder %s12, 1
          %s135 = scalar_select %p134, %s12, 1
          %s136 = smul.addr %s135, 54
          %s137 = smul.addr %s136, 8
          %s138 = scalar_lea.vmem %s0, %s137
        $region28: #{tpu_custom_call.1} parent=23 // pred_fallthru
          _
      $region24: #{tpu_custom_call.1} parent=5 // pred_fallthru
        _
      %p139 = scmp.le.s32.totalorder 1, %s12
      %p140 = scmp.lt.s32.totalorder %s12, 3
      %p141 = pnand %p139, %p140
      %p142 = pneg %p141
      // Predicated region
      $region29: #{tpu_custom_call.1} parent=5 // pred_check
        _
      $region30: #{tpu_custom_call.1} parent=5 // pred_check_branch
        %144 = sbr.rel (%p141) target = $region32
      $region31: #{tpu_custom_call.1} parent=5 // pred_region
        %s145 = ssub.s32 %s12, 1
        %p146 = scmp.lt.s32.totalorder %s17, 1
        %s147 = scalar_select %p146, %s17, 1
        %s148 = smul.addr %s147, 54
        %s149 = smul.addr %s148, 8
        %s150 = scalar_lea.vmem %s0, %s149
        %p151 = pneg %p38
        %p152 = pneg %p35
        %p153 = pneg %p59
        %p154 = pneg %p56
        %p155 = pneg %p80
        %p156 = pneg %p77
        %p157 = pneg %p106
        %p158 = pneg %p103
        %s159 = sand.u32 %s93, 1
        %s160 = scalar_lea.sflag [#allocation3], %s159
        %s161 = sand.u32 %s93, 1
        %s162 = smul.addr %s161, 256
        %s163 = scalar_lea.vmem [#allocation2], %s162
        %p164 = scmp.lt.s32.totalorder %s17, 1
        %s165 = scalar_select %p164, %s17, 1
        %s166 = smul.addr %s165, 54
        %s167 = smul.addr %s166, 8
        %s168 = scalar_lea.vmem %s0, %s167
        %v170 = vld [vmem:[%s168] sm:$0xff]
        %v171 = vld [vmem:[%s168 + $0x8] sm:$0xff]
        %v172 = vld [vmem:[%s168 + $0x10] sm:$0x3]
        %v173 = vld [vmem:[%s168 + $0x18] sm:$0xff]
        %v174 = vld [vmem:[%s168 + $0x20] sm:$0xff]
        %v175 = vld [vmem:[%s168 + $0x28] sm:$0x3]
        %v176 = vld [vmem:[%s168 + $0x30] sm:$0xff]
        %v177 = vld [vmem:[%s168 + $0x38] sm:$0xff]
        %v178 = vld [vmem:[%s168 + $0x40] sm:$0x3]
        %v179 = vld [vmem:[%s168 + $0x48] sm:$0xff]
        %v180 = vld [vmem:[%s168 + $0x50] sm:$0xff]
        %v181 = vld [vmem:[%s168 + $0x58] sm:$0x3]
        %v182 = vld [vmem:[%s168 + $0x60] sm:$0xff]
        %v183 = vld [vmem:[%s168 + $0x68] sm:$0xff]
        %v184 = vld [vmem:[%s168 + $0x70] sm:$0x3]
        %v185 = vld [vmem:[%s168 + $0x78] sm:$0xff]
        %v186 = vld [vmem:[%s168 + $0x80] sm:$0xff]
        %v187 = vld [vmem:[%s168 + $0x88] sm:$0x3]
        %v188 = vld [vmem:[%s168 + $0x90] sm:$0xff]
        %v189 = vld [vmem:[%s168 + $0x98] sm:$0xff]
        %v190 = vld [vmem:[%s168 + $0xa0] sm:$0x3]
        %v191 = vld [vmem:[%s168 + $0xa8] sm:$0xff]
        %v192 = vld [vmem:[%s168 + $0xb0] sm:$0xff]
        %v193 = vld [vmem:[%s168 + $0xb8] sm:$0x3]
        %v194 = vld [vmem:[%s168 + $0xc0] sm:$0xff]
        %v195 = vld [vmem:[%s168 + $0xc8] sm:$0xff]
        %v196 = vld [vmem:[%s168 + $0xd0] sm:$0x3]
        %v197 = vld [vmem:[%s168 + $0xd8] sm:$0xff]
        %v198 = vld [vmem:[%s168 + $0xe0] sm:$0xff]
        %v199 = vld [vmem:[%s168 + $0xe8] sm:$0x3]
        %v200 = vld [vmem:[%s168 + $0xf0] sm:$0xff]
        %v201 = vld [vmem:[%s168 + $0xf8] sm:$0xff]
        %v202 = vld [vmem:[%s168 + $0x100] sm:$0x3]
        %v203 = vld [vmem:[%s168 + $0x108] sm:$0xff]
        %v204 = vld [vmem:[%s168 + $0x110] sm:$0xff]
        %v205 = vld [vmem:[%s168 + $0x118] sm:$0x3]
        %v206 = vld [vmem:[%s168 + $0x120] sm:$0xff]
        %v207 = vld [vmem:[%s168 + $0x128] sm:$0xff]
        %v208 = vld [vmem:[%s168 + $0x130] sm:$0x3]
        %v209 = vld [vmem:[%s168 + $0x138] sm:$0xff]
        %v210 = vld [vmem:[%s168 + $0x140] sm:$0xff]
        %v211 = vld [vmem:[%s168 + $0x148] sm:$0x3]
        %v212 = vld [vmem:[%s168 + $0x150] sm:$0xff]
        %v213 = vld [vmem:[%s168 + $0x158] sm:$0xff]
        %v214 = vld [vmem:[%s168 + $0x160] sm:$0x3]
        %v215 = vld [vmem:[%s168 + $0x168] sm:$0xff]
        %v216 = vld [vmem:[%s168 + $0x170] sm:$0xff]
        %v217 = vld [vmem:[%s168 + $0x178] sm:$0x3]
        %v218 = vld [vmem:[%s168 + $0x180] sm:$0xff]
        %v219 = vld [vmem:[%s168 + $0x188] sm:$0xff]
        %v220 = vld [vmem:[%s168 + $0x190] sm:$0x3]
        %v221 = vld [vmem:[%s168 + $0x198] sm:$0xff]
        %v222 = vld [vmem:[%s168 + $0x1a0] sm:$0xff]
        %v223 = vld [vmem:[%s168 + $0x1a8] sm:$0x3]
        %vm272 = vcmask 1046528
        %v273 = vrot.slane %v170, 1
        %v274 = vrot.slane %v171, 1
        %v275 = vsel %vm272, %v273, %v274
        %v276 = vrot.slane %v172, 1
        %v277 = vsel %vm272, %v274, %v276
        %v278 = vrot.slane %v173, 1
        %v279 = vrot.slane %v174, 1
        %v280 = vsel %vm272, %v278, %v279
        %v281 = vrot.slane %v175, 1
        %v282 = vsel %vm272, %v279, %v281
        %v283 = vrot.slane %v176, 1
        %v284 = vrot.slane %v177, 1
        %v285 = vsel %vm272, %v283, %v284
        %v286 = vrot.slane %v178, 1
        %v287 = vsel %vm272, %v284, %v286
        %v288 = vrot.slane %v179, 1
        %v289 = vrot.slane %v180, 1
        %v290 = vsel %vm272, %v288, %v289
        %v291 = vrot.slane %v181, 1
        %v292 = vsel %vm272, %v289, %v291
        %v293 = vrot.slane %v182, 1
        %v294 = vrot.slane %v183, 1
        %v295 = vsel %vm272, %v293, %v294
        %v296 = vrot.slane %v184, 1
        %v297 = vsel %vm272, %v294, %v296
        %v298 = vrot.slane %v185, 1
        %v299 = vrot.slane %v186, 1
        %v300 = vsel %vm272, %v298, %v299
        %v301 = vrot.slane %v187, 1
        %v302 = vsel %vm272, %v299, %v301
        %v303 = vrot.slane %v188, 1
        %v304 = vrot.slane %v189, 1
        %v305 = vsel %vm272, %v303, %v304
        %v306 = vrot.slane %v190, 1
        %v307 = vsel %vm272, %v304, %v306
        %v308 = vrot.slane %v191, 1
        %v309 = vrot.slane %v192, 1
        %v310 = vsel %vm272, %v308, %v309
        %v311 = vrot.slane %v193, 1
        %v312 = vsel %vm272, %v309, %v311
        %v313 = vrot.slane %v194, 1
        %v314 = vrot.slane %v195, 1
        %v315 = vsel %vm272, %v313, %v314
        %v316 = vrot.slane %v196, 1
        %v317 = vsel %vm272, %v314, %v316
        %v318 = vrot.slane %v197, 1
        %v319 = vrot.slane %v198, 1
        %v320 = vsel %vm272, %v318, %v319
        %v321 = vrot.slane %v199, 1
        %v322 = vsel %vm272, %v319, %v321
        %v323 = vrot.slane %v200, 1
        %v324 = vrot.slane %v201, 1
        %v325 = vsel %vm272, %v323, %v324
        %v326 = vrot.slane %v202, 1
        %v327 = vsel %vm272, %v324, %v326
        %v328 = vrot.slane %v203, 1
        %v329 = vrot.slane %v204, 1
        %v330 = vsel %vm272, %v328, %v329
        %v331 = vrot.slane %v205, 1
        %v332 = vsel %vm272, %v329, %v331
        %v333 = vrot.slane %v206, 1
        %v334 = vrot.slane %v207, 1
        %v335 = vsel %vm272, %v333, %v334
        %v336 = vrot.slane %v208, 1
        %v337 = vsel %vm272, %v334, %v336
        %v338 = vrot.slane %v209, 1
        %v339 = vrot.slane %v210, 1
        %v340 = vsel %vm272, %v338, %v339
        %v341 = vrot.slane %v211, 1
        %v342 = vsel %vm272, %v339, %v341
        %v343 = vrot.slane %v212, 1
        %v344 = vrot.slane %v213, 1
        %v345 = vsel %vm272, %v343, %v344
        %v346 = vrot.slane %v214, 1
        %v347 = vsel %vm272, %v344, %v346
        %v348 = vrot.slane %v215, 1
        %v349 = vrot.slane %v216, 1
        %v350 = vsel %vm272, %v348, %v349
        %v351 = vrot.slane %v217, 1
        %v352 = vsel %vm272, %v349, %v351
        %353 = vrot.lane.b32.xlu0 %v275, 4
        %v354 = vpop.permute.xlu0 %353
        %355 = vrot.lane.b32.xlu0 %v277, 4
        %v356 = vpop.permute.xlu0 %355
        %357 = vrot.lane.b32.xlu0 %v280, 4
        %v358 = vpop.permute.xlu0 %357
        %359 = vrot.lane.b32.xlu0 %v282, 4
        %v360 = vpop.permute.xlu0 %359
        %361 = vrot.lane.b32.xlu0 %v285, 4
        %v362 = vpop.permute.xlu0 %361
        %363 = vrot.lane.b32.xlu0 %v287, 4
        %v364 = vpop.permute.xlu0 %363
        %365 = vrot.lane.b32.xlu0 %v290, 4
        %v366 = vpop.permute.xlu0 %365
        %367 = vrot.lane.b32.xlu0 %v292, 4
        %v368 = vpop.permute.xlu0 %367
        %369 = vrot.lane.b32.xlu0 %v295, 4
        %v370 = vpop.permute.xlu0 %369
        %371 = vrot.lane.b32.xlu0 %v297, 4
        %v372 = vpop.permute.xlu0 %371
        %373 = vrot.lane.b32.xlu0 %v300, 4
        %v374 = vpop.permute.xlu0 %373
        %375 = vrot.lane.b32.xlu0 %v302, 4
        %v376 = vpop.permute.xlu0 %375
        %377 = vrot.lane.b32.xlu0 %v305, 4
        %v378 = vpop.permute.xlu0 %377
        %379 = vrot.lane.b32.xlu0 %v307, 4
        %v380 = vpop.permute.xlu0 %379
        %381 = vrot.lane.b32.xlu0 %v310, 4
        %v382 = vpop.permute.xlu0 %381
        %383 = vrot.lane.b32.xlu0 %v312, 4
        %v384 = vpop.permute.xlu0 %383
        %385 = vrot.lane.b32.xlu0 %v315, 4
        %v386 = vpop.permute.xlu0 %385
        %387 = vrot.lane.b32.xlu0 %v317, 4
        %v388 = vpop.permute.xlu0 %387
        %389 = vrot.lane.b32.xlu0 %v320, 4
        %v390 = vpop.permute.xlu0 %389
        %391 = vrot.lane.b32.xlu0 %v322, 4
        %v392 = vpop.permute.xlu0 %391
        %393 = vrot.lane.b32.xlu0 %v325, 4
        %v394 = vpop.permute.xlu0 %393
        %395 = vrot.lane.b32.xlu0 %v327, 4
        %v396 = vpop.permute.xlu0 %395
        %397 = vrot.lane.b32.xlu0 %v330, 4
        %v398 = vpop.permute.xlu0 %397
        %399 = vrot.lane.b32.xlu0 %v332, 4
        %v400 = vpop.permute.xlu0 %399
        %401 = vrot.lane.b32.xlu0 %v335, 4
        %v402 = vpop.permute.xlu0 %401
        %403 = vrot.lane.b32.xlu0 %v337, 4
        %v404 = vpop.permute.xlu0 %403
        %405 = vrot.lane.b32.xlu0 %v340, 4
        %v406 = vpop.permute.xlu0 %405
        %407 = vrot.lane.b32.xlu0 %v342, 4
        %v408 = vpop.permute.xlu0 %407
        %409 = vrot.lane.b32.xlu0 %v345, 4
        %v410 = vpop.permute.xlu0 %409
        %411 = vrot.lane.b32.xlu0 %v347, 4
        %v412 = vpop.permute.xlu0 %411
        %413 = vrot.lane.b32.xlu0 %v350, 4
        %v414 = vpop.permute.xlu0 %413
        %415 = vrot.lane.b32.xlu0 %v352, 4
        %v416 = vpop.permute.xlu0 %415
        %vm449 = vcmask 1045504
        %v450 = vrot.slane %v170, 2
        %v451 = vrot.slane %v171, 2
        %v452 = vsel %vm449, %v450, %v451
        %v453 = vrot.slane %v172, 2
        %v454 = vsel %vm449, %v451, %v453
        %v455 = vrot.slane %v173, 2
        %v456 = vrot.slane %v174, 2
        %v457 = vsel %vm449, %v455, %v456
        %v458 = vrot.slane %v175, 2
        %v459 = vsel %vm449, %v456, %v458
        %v460 = vrot.slane %v176, 2
        %v461 = vrot.slane %v177, 2
        %v462 = vsel %vm449, %v460, %v461
        %v463 = vrot.slane %v178, 2
        %v464 = vsel %vm449, %v461, %v463
        %v465 = vrot.slane %v179, 2
        %v466 = vrot.slane %v180, 2
        %v467 = vsel %vm449, %v465, %v466
        %v468 = vrot.slane %v181, 2
        %v469 = vsel %vm449, %v466, %v468
        %v470 = vrot.slane %v182, 2
        %v471 = vrot.slane %v183, 2
        %v472 = vsel %vm449, %v470, %v471
        %v473 = vrot.slane %v184, 2
        %v474 = vsel %vm449, %v471, %v473
        %v475 = vrot.slane %v185, 2
        %v476 = vrot.slane %v186, 2
        %v477 = vsel %vm449, %v475, %v476
        %v478 = vrot.slane %v187, 2
        %v479 = vsel %vm449, %v476, %v478
        %v480 = vrot.slane %v188, 2
        %v481 = vrot.slane %v189, 2
        %v482 = vsel %vm449, %v480, %v481
        %v483 = vrot.slane %v190, 2
        %v484 = vsel %vm449, %v481, %v483
        %v485 = vrot.slane %v191, 2
        %v486 = vrot.slane %v192, 2
        %v487 = vsel %vm449, %v485, %v486
        %v488 = vrot.slane %v193, 2
        %v489 = vsel %vm449, %v486, %v488
        %v490 = vrot.slane %v194, 2
        %v491 = vrot.slane %v195, 2
        %v492 = vsel %vm449, %v490, %v491
        %v493 = vrot.slane %v196, 2
        %v494 = vsel %vm449, %v491, %v493
        %v495 = vrot.slane %v197, 2
        %v496 = vrot.slane %v198, 2
        %v497 = vsel %vm449, %v495, %v496
        %v498 = vrot.slane %v199, 2
        %v499 = vsel %vm449, %v496, %v498
        %v500 = vrot.slane %v200, 2
        %v501 = vrot.slane %v201, 2
        %v502 = vsel %vm449, %v500, %v501
        %v503 = vrot.slane %v202, 2
        %v504 = vsel %vm449, %v501, %v503
        %v505 = vrot.slane %v203, 2
        %v506 = vrot.slane %v204, 2
        %v507 = vsel %vm449, %v505, %v506
        %v508 = vrot.slane %v205, 2
        %v509 = vsel %vm449, %v506, %v508
        %v510 = vrot.slane %v206, 2
        %v511 = vrot.slane %v207, 2
        %v512 = vsel %vm449, %v510, %v511
        %v513 = vrot.slane %v208, 2
        %v514 = vsel %vm449, %v511, %v513
        %v515 = vrot.slane %v209, 2
        %v516 = vrot.slane %v210, 2
        %v517 = vsel %vm449, %v515, %v516
        %v518 = vrot.slane %v211, 2
        %v519 = vsel %vm449, %v516, %v518
        %v520 = vrot.slane %v212, 2
        %v521 = vrot.slane %v213, 2
        %v522 = vsel %vm449, %v520, %v521
        %v523 = vrot.slane %v214, 2
        %v524 = vsel %vm449, %v521, %v523
        %v525 = vrot.slane %v215, 2
        %v526 = vrot.slane %v216, 2
        %v527 = vsel %vm449, %v525, %v526
        %v528 = vrot.slane %v217, 2
        %v529 = vsel %vm449, %v526, %v528
        %530 = vrot.lane.b32.xlu0 %v452, 8
        %v531 = vpop.permute.xlu0 %530
        %532 = vrot.lane.b32.xlu0 %v454, 8
        %v533 = vpop.permute.xlu0 %532
        %534 = vrot.lane.b32.xlu0 %v457, 8
        %v535 = vpop.permute.xlu0 %534
        %536 = vrot.lane.b32.xlu0 %v459, 8
        %v537 = vpop.permute.xlu0 %536
        %538 = vrot.lane.b32.xlu0 %v462, 8
        %v539 = vpop.permute.xlu0 %538
        %540 = vrot.lane.b32.xlu0 %v464, 8
        %v541 = vpop.permute.xlu0 %540
        %542 = vrot.lane.b32.xlu0 %v467, 8
        %v543 = vpop.permute.xlu0 %542
        %544 = vrot.lane.b32.xlu0 %v469, 8
        %v545 = vpop.permute.xlu0 %544
        %546 = vrot.lane.b32.xlu0 %v472, 8
        %v547 = vpop.permute.xlu0 %546
        %548 = vrot.lane.b32.xlu0 %v474, 8
        %v549 = vpop.permute.xlu0 %548
        %550 = vrot.lane.b32.xlu0 %v477, 8
        %v551 = vpop.permute.xlu0 %550
        %552 = vrot.lane.b32.xlu0 %v479, 8
        %v553 = vpop.permute.xlu0 %552
        %554 = vrot.lane.b32.xlu0 %v482, 8
        %v555 = vpop.permute.xlu0 %554
        %556 = vrot.lane.b32.xlu0 %v484, 8
        %v557 = vpop.permute.xlu0 %556
        %558 = vrot.lane.b32.xlu0 %v487, 8
        %v559 = vpop.permute.xlu0 %558
        %560 = vrot.lane.b32.xlu0 %v489, 8
        %v561 = vpop.permute.xlu0 %560
        %562 = vrot.lane.b32.xlu0 %v492, 8
        %v563 = vpop.permute.xlu0 %562
        %564 = vrot.lane.b32.xlu0 %v494, 8
        %v565 = vpop.permute.xlu0 %564
        %566 = vrot.lane.b32.xlu0 %v497, 8
        %v567 = vpop.permute.xlu0 %566
        %568 = vrot.lane.b32.xlu0 %v499, 8
        %v569 = vpop.permute.xlu0 %568
        %570 = vrot.lane.b32.xlu0 %v502, 8
        %v571 = vpop.permute.xlu0 %570
        %572 = vrot.lane.b32.xlu0 %v504, 8
        %v573 = vpop.permute.xlu0 %572
        %574 = vrot.lane.b32.xlu0 %v507, 8
        %v575 = vpop.permute.xlu0 %574
        %576 = vrot.lane.b32.xlu0 %v509, 8
        %v577 = vpop.permute.xlu0 %576
        %578 = vrot.lane.b32.xlu0 %v512, 8
        %v579 = vpop.permute.xlu0 %578
        %580 = vrot.lane.b32.xlu0 %v514, 8
        %v581 = vpop.permute.xlu0 %580
        %582 = vrot.lane.b32.xlu0 %v517, 8
        %v583 = vpop.permute.xlu0 %582
        %584 = vrot.lane.b32.xlu0 %v519, 8
        %v585 = vpop.permute.xlu0 %584
        %586 = vrot.lane.b32.xlu0 %v522, 8
        %v587 = vpop.permute.xlu0 %586
        %588 = vrot.lane.b32.xlu0 %v524, 8
        %v589 = vpop.permute.xlu0 %588
        %590 = vrot.lane.b32.xlu0 %v527, 8
        %v591 = vpop.permute.xlu0 %590
        %592 = vrot.lane.b32.xlu0 %v529, 8
        %v593 = vpop.permute.xlu0 %592
        %628 = vrot.lane.b32.xlu0 %v173, 12
        %v629 = vpop.permute.xlu0 %628
        %630 = vrot.lane.b32.xlu0 %v174, 12
        %v631 = vpop.permute.xlu0 %630
        %632 = vrot.lane.b32.xlu0 %v176, 12
        %v633 = vpop.permute.xlu0 %632
        %634 = vrot.lane.b32.xlu0 %v177, 12
        %v635 = vpop.permute.xlu0 %634
        %636 = vrot.lane.b32.xlu0 %v179, 12
        %v637 = vpop.permute.xlu0 %636
        %638 = vrot.lane.b32.xlu0 %v180, 12
        %v639 = vpop.permute.xlu0 %638
        %640 = vrot.lane.b32.xlu0 %v182, 12
        %v641 = vpop.permute.xlu0 %640
        %642 = vrot.lane.b32.xlu0 %v183, 12
        %v643 = vpop.permute.xlu0 %642
        %644 = vrot.lane.b32.xlu0 %v185, 12
        %v645 = vpop.permute.xlu0 %644
        %646 = vrot.lane.b32.xlu0 %v186, 12
        %v647 = vpop.permute.xlu0 %646
        %648 = vrot.lane.b32.xlu0 %v188, 12
        %v649 = vpop.permute.xlu0 %648
        %650 = vrot.lane.b32.xlu0 %v189, 12
        %v651 = vpop.permute.xlu0 %650
        %652 = vrot.lane.b32.xlu0 %v191, 12
        %v653 = vpop.permute.xlu0 %652
        %654 = vrot.lane.b32.xlu0 %v192, 12
        %v655 = vpop.permute.xlu0 %654
        %656 = vrot.lane.b32.xlu0 %v194, 12
        %v657 = vpop.permute.xlu0 %656
        %658 = vrot.lane.b32.xlu0 %v195, 12
        %v659 = vpop.permute.xlu0 %658
        %660 = vrot.lane.b32.xlu0 %v197, 12
        %v661 = vpop.permute.xlu0 %660
        %662 = vrot.lane.b32.xlu0 %v198, 12
        %v663 = vpop.permute.xlu0 %662
        %664 = vrot.lane.b32.xlu0 %v200, 12
        %v665 = vpop.permute.xlu0 %664
        %666 = vrot.lane.b32.xlu0 %v201, 12
        %v667 = vpop.permute.xlu0 %666
        %668 = vrot.lane.b32.xlu0 %v203, 12
        %v669 = vpop.permute.xlu0 %668
        %670 = vrot.lane.b32.xlu0 %v204, 12
        %v671 = vpop.permute.xlu0 %670
        %672 = vrot.lane.b32.xlu0 %v206, 12
        %v673 = vpop.permute.xlu0 %672
        %674 = vrot.lane.b32.xlu0 %v207, 12
        %v675 = vpop.permute.xlu0 %674
        %676 = vrot.lane.b32.xlu0 %v209, 12
        %v677 = vpop.permute.xlu0 %676
        %678 = vrot.lane.b32.xlu0 %v210, 12
        %v679 = vpop.permute.xlu0 %678
        %680 = vrot.lane.b32.xlu0 %v212, 12
        %v681 = vpop.permute.xlu0 %680
        %682 = vrot.lane.b32.xlu0 %v213, 12
        %v683 = vpop.permute.xlu0 %682
        %684 = vrot.lane.b32.xlu0 %v215, 12
        %v685 = vpop.permute.xlu0 %684
        %686 = vrot.lane.b32.xlu0 %v216, 12
        %v687 = vpop.permute.xlu0 %686
        %688 = vrot.lane.b32.xlu0 %v218, 12
        %v689 = vpop.permute.xlu0 %688
        %690 = vrot.lane.b32.xlu0 %v219, 12
        %v691 = vpop.permute.xlu0 %690
        %v725 = vrot.slane %v218, 1
        %v726 = vrot.slane %v219, 1
        %v727 = vsel %vm272, %v725, %v726
        %v728 = vrot.slane %v220, 1
        %v729 = vsel %vm272, %v726, %v728
        %730 = vrot.lane.b32.xlu0 %v280, 16
        %v731 = vpop.permute.xlu0 %730
        %732 = vrot.lane.b32.xlu0 %v282, 16
        %v733 = vpop.permute.xlu0 %732
        %734 = vrot.lane.b32.xlu0 %v285, 16
        %v735 = vpop.permute.xlu0 %734
        %736 = vrot.lane.b32.xlu0 %v287, 16
        %v737 = vpop.permute.xlu0 %736
        %738 = vrot.lane.b32.xlu0 %v290, 16
        %v739 = vpop.permute.xlu0 %738
        %740 = vrot.lane.b32.xlu0 %v292, 16
        %v741 = vpop.permute.xlu0 %740
        %742 = vrot.lane.b32.xlu0 %v295, 16
        %v743 = vpop.permute.xlu0 %742
        %744 = vrot.lane.b32.xlu0 %v297, 16
        %v745 = vpop.permute.xlu0 %744
        %746 = vrot.lane.b32.xlu0 %v300, 16
        %v747 = vpop.permute.xlu0 %746
        %748 = vrot.lane.b32.xlu0 %v302, 16
        %v749 = vpop.permute.xlu0 %748
        %750 = vrot.lane.b32.xlu0 %v305, 16
        %v751 = vpop.permute.xlu0 %750
        %752 = vrot.lane.b32.xlu0 %v307, 16
        %v753 = vpop.permute.xlu0 %752
        %754 = vrot.lane.b32.xlu0 %v310, 16
        %v755 = vpop.permute.xlu0 %754
        %756 = vrot.lane.b32.xlu0 %v312, 16
        %v757 = vpop.permute.xlu0 %756
        %758 = vrot.lane.b32.xlu0 %v315, 16
        %v759 = vpop.permute.xlu0 %758
        %760 = vrot.lane.b32.xlu0 %v317, 16
        %v761 = vpop.permute.xlu0 %760
        %762 = vrot.lane.b32.xlu0 %v320, 16
        %v763 = vpop.permute.xlu0 %762
        %764 = vrot.lane.b32.xlu0 %v322, 16
        %v765 = vpop.permute.xlu0 %764
        %766 = vrot.lane.b32.xlu0 %v325, 16
        %v767 = vpop.permute.xlu0 %766
        %768 = vrot.lane.b32.xlu0 %v327, 16
        %v769 = vpop.permute.xlu0 %768
        %770 = vrot.lane.b32.xlu0 %v330, 16
        %v771 = vpop.permute.xlu0 %770
        %772 = vrot.lane.b32.xlu0 %v332, 16
        %v773 = vpop.permute.xlu0 %772
        %774 = vrot.lane.b32.xlu0 %v335, 16
        %v775 = vpop.permute.xlu0 %774
        %776 = vrot.lane.b32.xlu0 %v337, 16
        %v777 = vpop.permute.xlu0 %776
        %778 = vrot.lane.b32.xlu0 %v340, 16
        %v779 = vpop.permute.xlu0 %778
        %780 = vrot.lane.b32.xlu0 %v342, 16
        %v781 = vpop.permute.xlu0 %780
        %782 = vrot.lane.b32.xlu0 %v345, 16
        %v783 = vpop.permute.xlu0 %782
        %784 = vrot.lane.b32.xlu0 %v347, 16
        %v785 = vpop.permute.xlu0 %784
        %786 = vrot.lane.b32.xlu0 %v350, 16
        %v787 = vpop.permute.xlu0 %786
        %788 = vrot.lane.b32.xlu0 %v352, 16
        %v789 = vpop.permute.xlu0 %788
        %790 = vrot.lane.b32.xlu0 %v727, 16
        %v791 = vpop.permute.xlu0 %790
        %792 = vrot.lane.b32.xlu0 %v729, 16
        %v793 = vpop.permute.xlu0 %792
        %v826 = vrot.slane %v218, 2
        %v827 = vrot.slane %v219, 2
        %v828 = vsel %vm449, %v826, %v827
        %v829 = vrot.slane %v220, 2
        %v830 = vsel %vm449, %v827, %v829
        %831 = vrot.lane.b32.xlu0 %v457, 20
        %v832 = vpop.permute.xlu0 %831
        %833 = vrot.lane.b32.xlu0 %v459, 20
        %v834 = vpop.permute.xlu0 %833
        %835 = vrot.lane.b32.xlu0 %v462, 20
        %v836 = vpop.permute.xlu0 %835
        %837 = vrot.lane.b32.xlu0 %v464, 20
        %v838 = vpop.permute.xlu0 %837
        %839 = vrot.lane.b32.xlu0 %v467, 20
        %v840 = vpop.permute.xlu0 %839
        %841 = vrot.lane.b32.xlu0 %v469, 20
        %v842 = vpop.permute.xlu0 %841
        %843 = vrot.lane.b32.xlu0 %v472, 20
        %v844 = vpop.permute.xlu0 %843
        %845 = vrot.lane.b32.xlu0 %v474, 20
        %v846 = vpop.permute.xlu0 %845
        %847 = vrot.lane.b32.xlu0 %v477, 20
        %v848 = vpop.permute.xlu0 %847
        %849 = vrot.lane.b32.xlu0 %v479, 20
        %v850 = vpop.permute.xlu0 %849
        %851 = vrot.lane.b32.xlu0 %v482, 20
        %v852 = vpop.permute.xlu0 %851
        %853 = vrot.lane.b32.xlu0 %v484, 20
        %v854 = vpop.permute.xlu0 %853
        %855 = vrot.lane.b32.xlu0 %v487, 20
        %v856 = vpop.permute.xlu0 %855
        %857 = vrot.lane.b32.xlu0 %v489, 20
        %v858 = vpop.permute.xlu0 %857
        %859 = vrot.lane.b32.xlu0 %v492, 20
        %v860 = vpop.permute.xlu0 %859
        %861 = vrot.lane.b32.xlu0 %v494, 20
        %v862 = vpop.permute.xlu0 %861
        %863 = vrot.lane.b32.xlu0 %v497, 20
        %v864 = vpop.permute.xlu0 %863
        %865 = vrot.lane.b32.xlu0 %v499, 20
        %v866 = vpop.permute.xlu0 %865
        %867 = vrot.lane.b32.xlu0 %v502, 20
        %v868 = vpop.permute.xlu0 %867
        %869 = vrot.lane.b32.xlu0 %v504, 20
        %v870 = vpop.permute.xlu0 %869
        %871 = vrot.lane.b32.xlu0 %v507, 20
        %v872 = vpop.permute.xlu0 %871
        %873 = vrot.lane.b32.xlu0 %v509, 20
        %v874 = vpop.permute.xlu0 %873
        %875 = vrot.lane.b32.xlu0 %v512, 20
        %v876 = vpop.permute.xlu0 %875
        %877 = vrot.lane.b32.xlu0 %v514, 20
        %v878 = vpop.permute.xlu0 %877
        %879 = vrot.lane.b32.xlu0 %v517, 20
        %v880 = vpop.permute.xlu0 %879
        %881 = vrot.lane.b32.xlu0 %v519, 20
        %v882 = vpop.permute.xlu0 %881
        %883 = vrot.lane.b32.xlu0 %v522, 20
        %v884 = vpop.permute.xlu0 %883
        %885 = vrot.lane.b32.xlu0 %v524, 20
        %v886 = vpop.permute.xlu0 %885
        %887 = vrot.lane.b32.xlu0 %v527, 20
        %v888 = vpop.permute.xlu0 %887
        %889 = vrot.lane.b32.xlu0 %v529, 20
        %v890 = vpop.permute.xlu0 %889
        %891 = vrot.lane.b32.xlu0 %v828, 20
        %v892 = vpop.permute.xlu0 %891
        %893 = vrot.lane.b32.xlu0 %v830, 20
        %v894 = vpop.permute.xlu0 %893
        %929 = vrot.lane.b32.xlu0 %v176, 24
        %v930 = vpop.permute.xlu0 %929
        %931 = vrot.lane.b32.xlu0 %v177, 24
        %v932 = vpop.permute.xlu0 %931
        %933 = vrot.lane.b32.xlu0 %v179, 24
        %v934 = vpop.permute.xlu0 %933
        %935 = vrot.lane.b32.xlu0 %v180, 24
        %v936 = vpop.permute.xlu0 %935
        %937 = vrot.lane.b32.xlu0 %v182, 24
        %v938 = vpop.permute.xlu0 %937
        %939 = vrot.lane.b32.xlu0 %v183, 24
        %v940 = vpop.permute.xlu0 %939
        %941 = vrot.lane.b32.xlu0 %v185, 24
        %v942 = vpop.permute.xlu0 %941
        %943 = vrot.lane.b32.xlu0 %v186, 24
        %v944 = vpop.permute.xlu0 %943
        %945 = vrot.lane.b32.xlu0 %v188, 24
        %v946 = vpop.permute.xlu0 %945
        %947 = vrot.lane.b32.xlu0 %v189, 24
        %v948 = vpop.permute.xlu0 %947
        %949 = vrot.lane.b32.xlu0 %v191, 24
        %v950 = vpop.permute.xlu0 %949
        %951 = vrot.lane.b32.xlu0 %v192, 24
        %v952 = vpop.permute.xlu0 %951
        %953 = vrot.lane.b32.xlu0 %v194, 24
        %v954 = vpop.permute.xlu0 %953
        %955 = vrot.lane.b32.xlu0 %v195, 24
        %v956 = vpop.permute.xlu0 %955
        %957 = vrot.lane.b32.xlu0 %v197, 24
        %v958 = vpop.permute.xlu0 %957
        %959 = vrot.lane.b32.xlu0 %v198, 24
        %v960 = vpop.permute.xlu0 %959
        %961 = vrot.lane.b32.xlu0 %v200, 24
        %v962 = vpop.permute.xlu0 %961
        %963 = vrot.lane.b32.xlu0 %v201, 24
        %v964 = vpop.permute.xlu0 %963
        %965 = vrot.lane.b32.xlu0 %v203, 24
        %v966 = vpop.permute.xlu0 %965
        %967 = vrot.lane.b32.xlu0 %v204, 24
        %v968 = vpop.permute.xlu0 %967
        %969 = vrot.lane.b32.xlu0 %v206, 24
        %v970 = vpop.permute.xlu0 %969
        %971 = vrot.lane.b32.xlu0 %v207, 24
        %v972 = vpop.permute.xlu0 %971
        %973 = vrot.lane.b32.xlu0 %v209, 24
        %v974 = vpop.permute.xlu0 %973
        %975 = vrot.lane.b32.xlu0 %v210, 24
        %v976 = vpop.permute.xlu0 %975
        %977 = vrot.lane.b32.xlu0 %v212, 24
        %v978 = vpop.permute.xlu0 %977
        %979 = vrot.lane.b32.xlu0 %v213, 24
        %v980 = vpop.permute.xlu0 %979
        %981 = vrot.lane.b32.xlu0 %v215, 24
        %v982 = vpop.permute.xlu0 %981
        %983 = vrot.lane.b32.xlu0 %v216, 24
        %v984 = vpop.permute.xlu0 %983
        %985 = vrot.lane.b32.xlu0 %v218, 24
        %v986 = vpop.permute.xlu0 %985
        %987 = vrot.lane.b32.xlu0 %v219, 24
        %v988 = vpop.permute.xlu0 %987
        %989 = vrot.lane.b32.xlu0 %v221, 24
        %v990 = vpop.permute.xlu0 %989
        %991 = vrot.lane.b32.xlu0 %v222, 24
        %v992 = vpop.permute.xlu0 %991
        %v1026 = vrot.slane %v221, 1
        %v1027 = vrot.slane %v222, 1
        %v1028 = vsel %vm272, %v1026, %v1027
        %v1029 = vrot.slane %v223, 1
        %v1030 = vsel %vm272, %v1027, %v1029
        %1031 = vrot.lane.b32.xlu0 %v285, 28
        %v1032 = vpop.permute.xlu0 %1031
        %1033 = vrot.lane.b32.xlu0 %v287, 28
        %v1034 = vpop.permute.xlu0 %1033
        %1035 = vrot.lane.b32.xlu0 %v290, 28
        %v1036 = vpop.permute.xlu0 %1035
        %1037 = vrot.lane.b32.xlu0 %v292, 28
        %v1038 = vpop.permute.xlu0 %1037
        %1039 = vrot.lane.b32.xlu0 %v295, 28
        %v1040 = vpop.permute.xlu0 %1039
        %1041 = vrot.lane.b32.xlu0 %v297, 28
        %v1042 = vpop.permute.xlu0 %1041
        %1043 = vrot.lane.b32.xlu0 %v300, 28
        %v1044 = vpop.permute.xlu0 %1043
        %1045 = vrot.lane.b32.xlu0 %v302, 28
        %v1046 = vpop.permute.xlu0 %1045
        %1047 = vrot.lane.b32.xlu0 %v305, 28
        %v1048 = vpop.permute.xlu0 %1047
        %1049 = vrot.lane.b32.xlu0 %v307, 28
        %v1050 = vpop.permute.xlu0 %1049
        %1051 = vrot.lane.b32.xlu0 %v310, 28
        %v1052 = vpop.permute.xlu0 %1051
        %1053 = vrot.lane.b32.xlu0 %v312, 28
        %v1054 = vpop.permute.xlu0 %1053
        %1055 = vrot.lane.b32.xlu0 %v315, 28
        %v1056 = vpop.permute.xlu0 %1055
        %1057 = vrot.lane.b32.xlu0 %v317, 28
        %v1058 = vpop.permute.xlu0 %1057
        %1059 = vrot.lane.b32.xlu0 %v320, 28
        %v1060 = vpop.permute.xlu0 %1059
        %1061 = vrot.lane.b32.xlu0 %v322, 28
        %v1062 = vpop.permute.xlu0 %1061
        %1063 = vrot.lane.b32.xlu0 %v325, 28
        %v1064 = vpop.permute.xlu0 %1063
        %1065 = vrot.lane.b32.xlu0 %v327, 28
        %v1066 = vpop.permute.xlu0 %1065
        %1067 = vrot.lane.b32.xlu0 %v330, 28
        %v1068 = vpop.permute.xlu0 %1067
        %1069 = vrot.lane.b32.xlu0 %v332, 28
        %v1070 = vpop.permute.xlu0 %1069
        %1071 = vrot.lane.b32.xlu0 %v335, 28
        %v1072 = vpop.permute.xlu0 %1071
        %1073 = vrot.lane.b32.xlu0 %v337, 28
        %v1074 = vpop.permute.xlu0 %1073
        %1075 = vrot.lane.b32.xlu0 %v340, 28
        %v1076 = vpop.permute.xlu0 %1075
        %1077 = vrot.lane.b32.xlu0 %v342, 28
        %v1078 = vpop.permute.xlu0 %1077
        %1079 = vrot.lane.b32.xlu0 %v345, 28
        %v1080 = vpop.permute.xlu0 %1079
        %1081 = vrot.lane.b32.xlu0 %v347, 28
        %v1082 = vpop.permute.xlu0 %1081
        %1083 = vrot.lane.b32.xlu0 %v350, 28
        %v1084 = vpop.permute.xlu0 %1083
        %1085 = vrot.lane.b32.xlu0 %v352, 28
        %v1086 = vpop.permute.xlu0 %1085
        %1087 = vrot.lane.b32.xlu0 %v727, 28
        %v1088 = vpop.permute.xlu0 %1087
        %1089 = vrot.lane.b32.xlu0 %v729, 28
        %v1090 = vpop.permute.xlu0 %1089
        %1091 = vrot.lane.b32.xlu0 %v1028, 28
        %v1092 = vpop.permute.xlu0 %1091
        %1093 = vrot.lane.b32.xlu0 %v1030, 28
        %v1094 = vpop.permute.xlu0 %1093
        %v1127 = vrot.slane %v221, 2
        %v1128 = vrot.slane %v222, 2
        %v1129 = vsel %vm449, %v1127, %v1128
        %v1130 = vrot.slane %v223, 2
        %v1131 = vsel %vm449, %v1128, %v1130
        %1132 = vrot.lane.b32.xlu0 %v462, 32
        %v1133 = vpop.permute.xlu0 %1132
        %1134 = vrot.lane.b32.xlu0 %v464, 32
        %v1135 = vpop.permute.xlu0 %1134
        %1136 = vrot.lane.b32.xlu0 %v467, 32
        %v1137 = vpop.permute.xlu0 %1136
        %1138 = vrot.lane.b32.xlu0 %v469, 32
        %v1139 = vpop.permute.xlu0 %1138
        %1140 = vrot.lane.b32.xlu0 %v472, 32
        %v1141 = vpop.permute.xlu0 %1140
        %1142 = vrot.lane.b32.xlu0 %v474, 32
        %v1143 = vpop.permute.xlu0 %1142
        %1144 = vrot.lane.b32.xlu0 %v477, 32
        %v1145 = vpop.permute.xlu0 %1144
        %1146 = vrot.lane.b32.xlu0 %v479, 32
        %v1147 = vpop.permute.xlu0 %1146
        %1148 = vrot.lane.b32.xlu0 %v482, 32
        %v1149 = vpop.permute.xlu0 %1148
        %1150 = vrot.lane.b32.xlu0 %v484, 32
        %v1151 = vpop.permute.xlu0 %1150
        %1152 = vrot.lane.b32.xlu0 %v487, 32
        %v1153 = vpop.permute.xlu0 %1152
        %1154 = vrot.lane.b32.xlu0 %v489, 32
        %v1155 = vpop.permute.xlu0 %1154
        %1156 = vrot.lane.b32.xlu0 %v492, 32
        %v1157 = vpop.permute.xlu0 %1156
        %1158 = vrot.lane.b32.xlu0 %v494, 32
        %v1159 = vpop.permute.xlu0 %1158
        %1160 = vrot.lane.b32.xlu0 %v497, 32
        %v1161 = vpop.permute.xlu0 %1160
        %1162 = vrot.lane.b32.xlu0 %v499, 32
        %v1163 = vpop.permute.xlu0 %1162
        %1164 = vrot.lane.b32.xlu0 %v502, 32
        %v1165 = vpop.permute.xlu0 %1164
        %1166 = vrot.lane.b32.xlu0 %v504, 32
        %v1167 = vpop.permute.xlu0 %1166
        %1168 = vrot.lane.b32.xlu0 %v507, 32
        %v1169 = vpop.permute.xlu0 %1168
        %1170 = vrot.lane.b32.xlu0 %v509, 32
        %v1171 = vpop.permute.xlu0 %1170
        %1172 = vrot.lane.b32.xlu0 %v512, 32
        %v1173 = vpop.permute.xlu0 %1172
        %1174 = vrot.lane.b32.xlu0 %v514, 32
        %v1175 = vpop.permute.xlu0 %1174
        %1176 = vrot.lane.b32.xlu0 %v517, 32
        %v1177 = vpop.permute.xlu0 %1176
        %1178 = vrot.lane.b32.xlu0 %v519, 32
        %v1179 = vpop.permute.xlu0 %1178
        %1180 = vrot.lane.b32.xlu0 %v522, 32
        %v1181 = vpop.permute.xlu0 %1180
        %1182 = vrot.lane.b32.xlu0 %v524, 32
        %v1183 = vpop.permute.xlu0 %1182
        %1184 = vrot.lane.b32.xlu0 %v527, 32
        %v1185 = vpop.permute.xlu0 %1184
        %1186 = vrot.lane.b32.xlu0 %v529, 32
        %v1187 = vpop.permute.xlu0 %1186
        %1188 = vrot.lane.b32.xlu0 %v828, 32
        %v1189 = vpop.permute.xlu0 %1188
        %1190 = vrot.lane.b32.xlu0 %v830, 32
        %v1191 = vpop.permute.xlu0 %1190
        %1192 = vrot.lane.b32.xlu0 %v1129, 32
        %v1193 = vpop.permute.xlu0 %1192
        %1194 = vrot.lane.b32.xlu0 %v1131, 32
        %v1195 = vpop.permute.xlu0 %1194
        %vm1228 = vcmask 31744
        %v1229 = vsel %vm1228, %v170, %v354
        %v1230 = vsel %vm1228, %v171, %v356
        %v1231 = vsel %vm1228, %v173, %v358
        %v1232 = vsel %vm1228, %v174, %v360
        %v1233 = vsel %vm1228, %v176, %v362
        %v1234 = vsel %vm1228, %v177, %v364
        %v1235 = vsel %vm1228, %v179, %v366
        %v1236 = vsel %vm1228, %v180, %v368
        %v1237 = vsel %vm1228, %v182, %v370
        %v1238 = vsel %vm1228, %v183, %v372
        %v1239 = vsel %vm1228, %v185, %v374
        %v1240 = vsel %vm1228, %v186, %v376
        %v1241 = vsel %vm1228, %v188, %v378
        %v1242 = vsel %vm1228, %v189, %v380
        %v1243 = vsel %vm1228, %v191, %v382
        %v1244 = vsel %vm1228, %v192, %v384
        %v1245 = vsel %vm1228, %v194, %v386
        %v1246 = vsel %vm1228, %v195, %v388
        %v1247 = vsel %vm1228, %v197, %v390
        %v1248 = vsel %vm1228, %v198, %v392
        %v1249 = vsel %vm1228, %v200, %v394
        %v1250 = vsel %vm1228, %v201, %v396
        %v1251 = vsel %vm1228, %v203, %v398
        %v1252 = vsel %vm1228, %v204, %v400
        %v1253 = vsel %vm1228, %v206, %v402
        %v1254 = vsel %vm1228, %v207, %v404
        %v1255 = vsel %vm1228, %v209, %v406
        %v1256 = vsel %vm1228, %v210, %v408
        %v1257 = vsel %vm1228, %v212, %v410
        %v1258 = vsel %vm1228, %v213, %v412
        %v1259 = vsel %vm1228, %v215, %v414
        %v1260 = vsel %vm1228, %v216, %v416
        %vm1261 = vcmask 64512
        %v1262 = vsel %vm1261, %v1229, %v531
        %v1263 = vsel %vm1261, %v1230, %v533
        %v1264 = vsel %vm1261, %v1231, %v535
        %v1265 = vsel %vm1261, %v1232, %v537
        %v1266 = vsel %vm1261, %v1233, %v539
        %v1267 = vsel %vm1261, %v1234, %v541
        %v1268 = vsel %vm1261, %v1235, %v543
        %v1269 = vsel %vm1261, %v1236, %v545
        %v1270 = vsel %vm1261, %v1237, %v547
        %v1271 = vsel %vm1261, %v1238, %v549
        %v1272 = vsel %vm1261, %v1239, %v551
        %v1273 = vsel %vm1261, %v1240, %v553
        %v1274 = vsel %vm1261, %v1241, %v555
        %v1275 = vsel %vm1261, %v1242, %v557
        %v1276 = vsel %vm1261, %v1243, %v559
        %v1277 = vsel %vm1261, %v1244, %v561
        %v1278 = vsel %vm1261, %v1245, %v563
        %v1279 = vsel %vm1261, %v1246, %v565
        %v1280 = vsel %vm1261, %v1247, %v567
        %v1281 = vsel %vm1261, %v1248, %v569
        %v1282 = vsel %vm1261, %v1249, %v571
        %v1283 = vsel %vm1261, %v1250, %v573
        %v1284 = vsel %vm1261, %v1251, %v575
        %v1285 = vsel %vm1261, %v1252, %v577
        %v1286 = vsel %vm1261, %v1253, %v579
        %v1287 = vsel %vm1261, %v1254, %v581
        %v1288 = vsel %vm1261, %v1255, %v583
        %v1289 = vsel %vm1261, %v1256, %v585
        %v1290 = vsel %vm1261, %v1257, %v587
        %v1291 = vsel %vm1261, %v1258, %v589
        %v1292 = vsel %vm1261, %v1259, %v591
        %v1293 = vsel %vm1261, %v1260, %v593
        %vm1294 = vcmask 97280
        %v1295 = vsel %vm1294, %v1262, %v629
        %v1296 = vsel %vm1294, %v1263, %v631
        %v1297 = vsel %vm1294, %v1264, %v633
        %v1298 = vsel %vm1294, %v1265, %v635
        %v1299 = vsel %vm1294, %v1266, %v637
        %v1300 = vsel %vm1294, %v1267, %v639
        %v1301 = vsel %vm1294, %v1268, %v641
        %v1302 = vsel %vm1294, %v1269, %v643
        %v1303 = vsel %vm1294, %v1270, %v645
        %v1304 = vsel %vm1294, %v1271, %v647
        %v1305 = vsel %vm1294, %v1272, %v649
        %v1306 = vsel %vm1294, %v1273, %v651
        %v1307 = vsel %vm1294, %v1274, %v653
        %v1308 = vsel %vm1294, %v1275, %v655
        %v1309 = vsel %vm1294, %v1276, %v657
        %v1310 = vsel %vm1294, %v1277, %v659
        %v1311 = vsel %vm1294, %v1278, %v661
        %v1312 = vsel %vm1294, %v1279, %v663
        %v1313 = vsel %vm1294, %v1280, %v665
        %v1314 = vsel %vm1294, %v1281, %v667
        %v1315 = vsel %vm1294, %v1282, %v669
        %v1316 = vsel %vm1294, %v1283, %v671
        %v1317 = vsel %vm1294, %v1284, %v673
        %v1318 = vsel %vm1294, %v1285, %v675
        %v1319 = vsel %vm1294, %v1286, %v677
        %v1320 = vsel %vm1294, %v1287, %v679
        %v1321 = vsel %vm1294, %v1288, %v681
        %v1322 = vsel %vm1294, %v1289, %v683
        %v1323 = vsel %vm1294, %v1290, %v685
        %v1324 = vsel %vm1294, %v1291, %v687
        %v1325 = vsel %vm1294, %v1292, %v689
        %v1326 = vsel %vm1294, %v1293, %v691
        %vm1327 = vcmask 130048
        %v1328 = vsel %vm1327, %v1295, %v731
        %v1329 = vsel %vm1327, %v1296, %v733
        %v1330 = vsel %vm1327, %v1297, %v735
        %v1331 = vsel %vm1327, %v1298, %v737
        %v1332 = vsel %vm1327, %v1299, %v739
        %v1333 = vsel %vm1327, %v1300, %v741
        %v1334 = vsel %vm1327, %v1301, %v743
        %v1335 = vsel %vm1327, %v1302, %v745
        %v1336 = vsel %vm1327, %v1303, %v747
        %v1337 = vsel %vm1327, %v1304, %v749
        %v1338 = vsel %vm1327, %v1305, %v751
        %v1339 = vsel %vm1327, %v1306, %v753
        %v1340 = vsel %vm1327, %v1307, %v755
        %v1341 = vsel %vm1327, %v1308, %v757
        %v1342 = vsel %vm1327, %v1309, %v759
        %v1343 = vsel %vm1327, %v1310, %v761
        %v1344 = vsel %vm1327, %v1311, %v763
        %v1345 = vsel %vm1327, %v1312, %v765
        %v1346 = vsel %vm1327, %v1313, %v767
        %v1347 = vsel %vm1327, %v1314, %v769
        %v1348 = vsel %vm1327, %v1315, %v771
        %v1349 = vsel %vm1327, %v1316, %v773
        %v1350 = vsel %vm1327, %v1317, %v775
        %v1351 = vsel %vm1327, %v1318, %v777
        %v1352 = vsel %vm1327, %v1319, %v779
        %v1353 = vsel %vm1327, %v1320, %v781
        %v1354 = vsel %vm1327, %v1321, %v783
        %v1355 = vsel %vm1327, %v1322, %v785
        %v1356 = vsel %vm1327, %v1323, %v787
        %v1357 = vsel %vm1327, %v1324, %v789
        %v1358 = vsel %vm1327, %v1325, %v791
        %v1359 = vsel %vm1327, %v1326, %v793
        %vm1360 = vcmask 162816
        %v1361 = vsel %vm1360, %v1328, %v832
        %v1362 = vsel %vm1360, %v1329, %v834
        %v1363 = vsel %vm1360, %v1330, %v836
        %v1364 = vsel %vm1360, %v1331, %v838
        %v1365 = vsel %vm1360, %v1332, %v840
        %v1366 = vsel %vm1360, %v1333, %v842
        %v1367 = vsel %vm1360, %v1334, %v844
        %v1368 = vsel %vm1360, %v1335, %v846
        %v1369 = vsel %vm1360, %v1336, %v848
        %v1370 = vsel %vm1360, %v1337, %v850
        %v1371 = vsel %vm1360, %v1338, %v852
        %v1372 = vsel %vm1360, %v1339, %v854
        %v1373 = vsel %vm1360, %v1340, %v856
        %v1374 = vsel %vm1360, %v1341, %v858
        %v1375 = vsel %vm1360, %v1342, %v860
        %v1376 = vsel %vm1360, %v1343, %v862
        %v1377 = vsel %vm1360, %v1344, %v864
        %v1378 = vsel %vm1360, %v1345, %v866
        %v1379 = vsel %vm1360, %v1346, %v868
        %v1380 = vsel %vm1360, %v1347, %v870
        %v1381 = vsel %vm1360, %v1348, %v872
        %v1382 = vsel %vm1360, %v1349, %v874
        %v1383 = vsel %vm1360, %v1350, %v876
        %v1384 = vsel %vm1360, %v1351, %v878
        %v1385 = vsel %vm1360, %v1352, %v880
        %v1386 = vsel %vm1360, %v1353, %v882
        %v1387 = vsel %vm1360, %v1354, %v884
        %v1388 = vsel %vm1360, %v1355, %v886
        %v1389 = vsel %vm1360, %v1356, %v888
        %v1390 = vsel %vm1360, %v1357, %v890
        %v1391 = vsel %vm1360, %v1358, %v892
        %v1392 = vsel %vm1360, %v1359, %v894
        %vm1393 = vcmask 195584
        %v1394 = vsel %vm1393, %v1361, %v930
        %v1395 = vsel %vm1393, %v1362, %v932
        %v1396 = vsel %vm1393, %v1363, %v934
        %v1397 = vsel %vm1393, %v1364, %v936
        %v1398 = vsel %vm1393, %v1365, %v938
        %v1399 = vsel %vm1393, %v1366, %v940
        %v1400 = vsel %vm1393, %v1367, %v942
        %v1401 = vsel %vm1393, %v1368, %v944
        %v1402 = vsel %vm1393, %v1369, %v946
        %v1403 = vsel %vm1393, %v1370, %v948
        %v1404 = vsel %vm1393, %v1371, %v950
        %v1405 = vsel %vm1393, %v1372, %v952
        %v1406 = vsel %vm1393, %v1373, %v954
        %v1407 = vsel %vm1393, %v1374, %v956
        %v1408 = vsel %vm1393, %v1375, %v958
        %v1409 = vsel %vm1393, %v1376, %v960
        %v1410 = vsel %vm1393, %v1377, %v962
        %v1411 = vsel %vm1393, %v1378, %v964
        %v1412 = vsel %vm1393, %v1379, %v966
        %v1413 = vsel %vm1393, %v1380, %v968
        %v1414 = vsel %vm1393, %v1381, %v970
        %v1415 = vsel %vm1393, %v1382, %v972
        %v1416 = vsel %vm1393, %v1383, %v974
        %v1417 = vsel %vm1393, %v1384, %v976
        %v1418 = vsel %vm1393, %v1385, %v978
        %v1419 = vsel %vm1393, %v1386, %v980
        %v1420 = vsel %vm1393, %v1387, %v982
        %v1421 = vsel %vm1393, %v1388, %v984
        %v1422 = vsel %vm1393, %v1389, %v986
        %v1423 = vsel %vm1393, %v1390, %v988
        %v1424 = vsel %vm1393, %v1391, %v990
        %v1425 = vsel %vm1393, %v1392, %v992
        %vm1426 = vcmask 228352
        %v1427 = vsel %vm1426, %v1394, %v1032
        %v1428 = vsel %vm1426, %v1395, %v1034
        %v1429 = vsel %vm1426, %v1396, %v1036
        %v1430 = vsel %vm1426, %v1397, %v1038
        %v1431 = vsel %vm1426, %v1398, %v1040
        %v1432 = vsel %vm1426, %v1399, %v1042
        %v1433 = vsel %vm1426, %v1400, %v1044
        %v1434 = vsel %vm1426, %v1401, %v1046
        %v1435 = vsel %vm1426, %v1402, %v1048
        %v1436 = vsel %vm1426, %v1403, %v1050
        %v1437 = vsel %vm1426, %v1404, %v1052
        %v1438 = vsel %vm1426, %v1405, %v1054
        %v1439 = vsel %vm1426, %v1406, %v1056
        %v1440 = vsel %vm1426, %v1407, %v1058
        %v1441 = vsel %vm1426, %v1408, %v1060
        %v1442 = vsel %vm1426, %v1409, %v1062
        %v1443 = vsel %vm1426, %v1410, %v1064
        %v1444 = vsel %vm1426, %v1411, %v1066
        %v1445 = vsel %vm1426, %v1412, %v1068
        %v1446 = vsel %vm1426, %v1413, %v1070
        %v1447 = vsel %vm1426, %v1414, %v1072
        %v1448 = vsel %vm1426, %v1415, %v1074
        %v1449 = vsel %vm1426, %v1416, %v1076
        %v1450 = vsel %vm1426, %v1417, %v1078
        %v1451 = vsel %vm1426, %v1418, %v1080
        %v1452 = vsel %vm1426, %v1419, %v1082
        %v1453 = vsel %vm1426, %v1420, %v1084
        %v1454 = vsel %vm1426, %v1421, %v1086
        %v1455 = vsel %vm1426, %v1422, %v1088
        %v1456 = vsel %vm1426, %v1423, %v1090
        %v1457 = vsel %vm1426, %v1424, %v1092
        %v1458 = vsel %vm1426, %v1425, %v1094
        %vm1459 = vcmask 261120
        %v1460 = vsel %vm1459, %v1427, %v1133
        %v1461 = vsel %vm1459, %v1428, %v1135
        %v1462 = vsel %vm1459, %v1429, %v1137
        %v1463 = vsel %vm1459, %v1430, %v1139
        %v1464 = vsel %vm1459, %v1431, %v1141
        %v1465 = vsel %vm1459, %v1432, %v1143
        %v1466 = vsel %vm1459, %v1433, %v1145
        %v1467 = vsel %vm1459, %v1434, %v1147
        %v1468 = vsel %vm1459, %v1435, %v1149
        %v1469 = vsel %vm1459, %v1436, %v1151
        %v1470 = vsel %vm1459, %v1437, %v1153
        %v1471 = vsel %vm1459, %v1438, %v1155
        %v1472 = vsel %vm1459, %v1439, %v1157
        %v1473 = vsel %vm1459, %v1440, %v1159
        %v1474 = vsel %vm1459, %v1441, %v1161
        %v1475 = vsel %vm1459, %v1442, %v1163
        %v1476 = vsel %vm1459, %v1443, %v1165
        %v1477 = vsel %vm1459, %v1444, %v1167
        %v1478 = vsel %vm1459, %v1445, %v1169
        %v1479 = vsel %vm1459, %v1446, %v1171
        %v1480 = vsel %vm1459, %v1447, %v1173
        %v1481 = vsel %vm1459, %v1448, %v1175
        %v1482 = vsel %vm1459, %v1449, %v1177
        %v1483 = vsel %vm1459, %v1450, %v1179
        %v1484 = vsel %vm1459, %v1451, %v1181
        %v1485 = vsel %vm1459, %v1452, %v1183
        %v1486 = vsel %vm1459, %v1453, %v1185
        %v1487 = vsel %vm1459, %v1454, %v1187
        %v1488 = vsel %vm1459, %v1455, %v1189
        %v1489 = vsel %vm1459, %v1456, %v1191
        %v1490 = vsel %vm1459, %v1457, %v1193
        %v1491 = vsel %vm1459, %v1458, %v1195
        %vm1492 = vcmask 293888
        %v1493 = vsel %vm1492, %v1460, 0.0
        %v1494 = vsel %vm1492, %v1461, 0.0
        %v1495 = vsel %vm1492, %v1462, 0.0
        %v1496 = vsel %vm1492, %v1463, 0.0
        %v1497 = vsel %vm1492, %v1464, 0.0
        %v1498 = vsel %vm1492, %v1465, 0.0
        %v1499 = vsel %vm1492, %v1466, 0.0
        %v1500 = vsel %vm1492, %v1467, 0.0
        %v1501 = vsel %vm1492, %v1468, 0.0
        %v1502 = vsel %vm1492, %v1469, 0.0
        %v1503 = vsel %vm1492, %v1470, 0.0
        %v1504 = vsel %vm1492, %v1471, 0.0
        %v1505 = vsel %vm1492, %v1472, 0.0
        %v1506 = vsel %vm1492, %v1473, 0.0
        %v1507 = vsel %vm1492, %v1474, 0.0
        %v1508 = vsel %vm1492, %v1475, 0.0
        %v1509 = vsel %vm1492, %v1476, 0.0
        %v1510 = vsel %vm1492, %v1477, 0.0
        %v1511 = vsel %vm1492, %v1478, 0.0
        %v1512 = vsel %vm1492, %v1479, 0.0
        %v1513 = vsel %vm1492, %v1480, 0.0
        %v1514 = vsel %vm1492, %v1481, 0.0
        %v1515 = vsel %vm1492, %v1482, 0.0
        %v1516 = vsel %vm1492, %v1483, 0.0
        %v1517 = vsel %vm1492, %v1484, 0.0
        %v1518 = vsel %vm1492, %v1485, 0.0
        %v1519 = vsel %vm1492, %v1486, 0.0
        %v1520 = vsel %vm1492, %v1487, 0.0
        %v1521 = vsel %vm1492, %v1488, 0.0
        %v1522 = vsel %vm1492, %v1489, 0.0
        %v1523 = vsel %vm1492, %v1490, 0.0
        %v1524 = vsel %vm1492, %v1491, 0.0
        %v1525 = vpack.c.bf16 %v1494, %v1493
        %v1526 = vpack.c.bf16 %v1496, %v1495
        %v1527 = vpack.c.bf16 %v1498, %v1497
        %v1528 = vpack.c.bf16 %v1500, %v1499
        %v1529 = vpack.c.bf16 %v1502, %v1501
        %v1530 = vpack.c.bf16 %v1504, %v1503
        %v1531 = vpack.c.bf16 %v1506, %v1505
        %v1532 = vpack.c.bf16 %v1508, %v1507
        %v1533 = vpack.c.bf16 %v1510, %v1509
        %v1534 = vpack.c.bf16 %v1512, %v1511
        %v1535 = vpack.c.bf16 %v1514, %v1513
        %v1536 = vpack.c.bf16 %v1516, %v1515
        %v1537 = vpack.c.bf16 %v1518, %v1517
        %v1538 = vpack.c.bf16 %v1520, %v1519
        %v1539 = vpack.c.bf16 %v1522, %v1521
        %v1540 = vpack.c.bf16 %v1524, %v1523
        %v1541 = vld [vmem:[%s1] sm:$0xf]
        %v1542 = vld [vmem:[%s1 + $0x4] sm:$0xf]
        %v1543 = vld [vmem:[%s1 + $0x8] sm:$0xf]
        %v1544 = vld [vmem:[%s1 + $0xc] sm:$0xf]
        %v1545 = vld [vmem:[%s1 + $0x10] sm:$0xf]
        %v1546 = vld [vmem:[%s1 + $0x14] sm:$0xf]
        %v1547 = vld [vmem:[%s1 + $0x18] sm:$0xf]
        %v1548 = vld [vmem:[%s1 + $0x1c] sm:$0xf]
        %v1549 = vld [vmem:[%s1 + $0x20] sm:$0xf]
        %v1550 = vld [vmem:[%s1 + $0x24] sm:$0xf]
        %v1551 = vld [vmem:[%s1 + $0x28] sm:$0xf]
        %v1552 = vld [vmem:[%s1 + $0x2c] sm:$0xf]
        %v1553 = vld [vmem:[%s1 + $0x30] sm:$0xf]
        %v1554 = vld [vmem:[%s1 + $0x34] sm:$0xf]
        %v1555 = vld [vmem:[%s1 + $0x38] sm:$0xf]
        %v1556 = vld [vmem:[%s1 + $0x3c] sm:$0xf]
        %v1573 = vunpack.c.l.b16 %v1541
        %v1574 = vunpack.c.l.b16 %v1542
        %v1575 = vunpack.c.l.b16 %v1543
        %v1576 = vunpack.c.l.b16 %v1544
        %v1577 = vunpack.c.l.b16 %v1545
        %v1578 = vunpack.c.l.b16 %v1546
        %v1579 = vunpack.c.l.b16 %v1547
        %v1580 = vunpack.c.l.b16 %v1548
        %v1581 = vunpack.c.l.b16 %v1549
        %v1582 = vunpack.c.l.b16 %v1550
        %v1583 = vunpack.c.l.b16 %v1551
        %v1584 = vunpack.c.l.b16 %v1552
        %v1585 = vunpack.c.l.b16 %v1553
        %v1586 = vunpack.c.l.b16 %v1554
        %v1587 = vunpack.c.l.b16 %v1555
        %v1588 = vunpack.c.l.b16 %v1556
        %v1589 = vpack.c.b16 %v1574, %v1573
        %v1590 = vpack.c.b16 %v1576, %v1575
        %v1591 = vpack.c.b16 %v1578, %v1577
        %v1592 = vpack.c.b16 %v1580, %v1579
        %v1593 = vpack.c.b16 %v1582, %v1581
        %v1594 = vpack.c.b16 %v1584, %v1583
        %v1595 = vpack.c.b16 %v1586, %v1585
        %v1596 = vpack.c.b16 %v1588, %v1587
        %1605 = vmatprep.subr.bf16.mxu0 0
        %1606 = vmatpush1.bf16.msra.mxu0 %v1589
        %1607 = vmatprep.subr.bf16.mxu0 0
        %1608 = vmatpush1.bf16.msra.mxu0 %v1590
        %1609 = vmatprep.subr.bf16.mxu0 0
        %1610 = vmatpush1.bf16.msra.mxu0 %v1591
        %1611 = vmatprep.subr.bf16.mxu0 0
        %1612 = vmatpush1.bf16.msra.mxu0 %v1592
        %1613 = vmatprep.subr.bf16.mxu0 0
        %1614 = vmatpush1.bf16.msra.mxu0 %v1593
        %1615 = vmatprep.subr.bf16.mxu0 0
        %1616 = vmatpush1.bf16.msra.mxu0 %v1594
        %1617 = vmatprep.subr.bf16.mxu0 0
        %1618 = vmatpush1.bf16.msra.mxu0 %v1595
        %1619 = vmatprep.subr.bf16.mxu0 0
        %1620 = vmatpush1.bf16.msra.mxu0 %v1596
        %1621 = vmatprep.subr.bf16.mxu0 0
        %1622 = vmatpush1.bf16.msra.mxu0 0
        %1623 = vmatprep.subr.bf16.mxu0 0
        %1624 = vmatpush1.bf16.msra.mxu0 0
        %1625 = vmatprep.subr.bf16.mxu0 0
        %1626 = vmatpush1.bf16.msra.mxu0 0
        %1627 = vmatprep.subr.bf16.mxu0 0
        %1628 = vmatpush1.bf16.msra.mxu0 0
        %1629 = vmatprep.subr.bf16.mxu0 0
        %1630 = vmatpush1.bf16.msra.mxu0 0
        %1631 = vmatprep.subr.bf16.mxu0 0
        %1632 = vmatpush1.bf16.msra.mxu0 0
        %1633 = vmatprep.subr.bf16.mxu0 0
        %1634 = vmatpush1.bf16.msra.mxu0 0
        %1635 = vmatprep.subr.bf16.mxu0 0
        %1636 = vmatpush1.bf16.msra.mxu0 0
        %1637 = vmatprep.mubr.bf16.mxu0 0
        %1638 = vmatmul.mubr.bf16.gmra.mrb[0].mxu0 %v1525
        %v1639 = vpop.f32.mrb[0].mxu0
        %v1640 = vadd.f32 0.0, %v1639
        %v1641 = vpop.f32.mrb[0].mxu0
        %v1642 = vpop.f32.mrb[0].mxu0
        %v1643 = vadd.f32 0.0, %v1642
        %v1644 = vpop.f32.mrb[0].mxu0
        %1645 = vmatprep.mubr.bf16.mxu0 0
        %1646 = vmatmul.mubr.bf16.gmra.mrb[0].mxu0 %v1526
        %v1647 = vpop.f32.mrb[0].mxu0
        %v1648 = vadd.f32 0.0, %v1647
        %v1649 = vpop.f32.mrb[0].mxu0
        %v1650 = vpop.f32.mrb[0].mxu0
        %v1651 = vadd.f32 0.0, %v1650
        %v1652 = vpop.f32.mrb[0].mxu0
        %1653 = vmatprep.mubr.bf16.mxu0 0
        %1654 = vmatmul.mubr.bf16.gmra.mrb[0].mxu0 %v1527
        %v1655 = vpop.f32.mrb[0].mxu0
        %v1656 = vadd.f32 0.0, %v1655
        %v1657 = vpop.f32.mrb[0].mxu0
        %v1658 = vpop.f32.mrb[0].mxu0
        %v1659 = vadd.f32 0.0, %v1658
        %v1660 = vpop.f32.mrb[0].mxu0
        %1661 = vmatprep.mubr.bf16.mxu0 0
        %1662 = vmatmul.mubr.bf16.gmra.mrb[0].mxu0 %v1528
        %v1663 = vpop.f32.mrb[0].mxu0
        %v1664 = vadd.f32 0.0, %v1663
        %v1665 = vpop.f32.mrb[0].mxu0
        %v1666 = vpop.f32.mrb[0].mxu0
        %v1667 = vadd.f32 0.0, %v1666
        %v1668 = vpop.f32.mrb[0].mxu0
        %1669 = vmatprep.mubr.bf16.mxu0 0
        %1670 = vmatmul.mubr.bf16.gmra.mrb[0].mxu0 %v1529
        %v1671 = vpop.f32.mrb[0].mxu0
        %v1672 = vadd.f32 0.0, %v1671
        %v1673 = vpop.f32.mrb[0].mxu0
        %v1674 = vpop.f32.mrb[0].mxu0
        %v1675 = vadd.f32 0.0, %v1674
        %v1676 = vpop.f32.mrb[0].mxu0
        %1677 = vmatprep.mubr.bf16.mxu0 0
        %1678 = vmatmul.mubr.bf16.gmra.mrb[0].mxu0 %v1530
        %v1679 = vpop.f32.mrb[0].mxu0
        %v1680 = vadd.f32 0.0, %v1679
        %v1681 = vpop.f32.mrb[0].mxu0
        %v1682 = vpop.f32.mrb[0].mxu0
        %v1683 = vadd.f32 0.0, %v1682
        %v1684 = vpop.f32.mrb[0].mxu0
        %1685 = vmatprep.mubr.bf16.mxu0 0
        %1686 = vmatmul.mubr.bf16.gmra.mrb[0].mxu0 %v1531
        %v1687 = vpop.f32.mrb[0].mxu0
        %v1688 = vadd.f32 0.0, %v1687
        %v1689 = vpop.f32.mrb[0].mxu0
        %v1690 = vpop.f32.mrb[0].mxu0
        %v1691 = vadd.f32 0.0, %v1690
        %v1692 = vpop.f32.mrb[0].mxu0
        %1693 = vmatprep.mubr.bf16.mxu0 0
        %1694 = vmatmul.mubr.bf16.gmra.mrb[0].mxu0 %v1532
        %v1695 = vpop.f32.mrb[0].mxu0
        %v1696 = vadd.f32 0.0, %v1695
        %v1697 = vpop.f32.mrb[0].mxu0
        %v1698 = vpop.f32.mrb[0].mxu0
        %v1699 = vadd.f32 0.0, %v1698
        %v1700 = vpop.f32.mrb[0].mxu0
        %1701 = vmatprep.mubr.bf16.mxu0 0
        %1702 = vmatmul.mubr.bf16.gmra.mrb[0].mxu0 %v1533
        %v1703 = vpop.f32.mrb[0].mxu0
        %v1704 = vadd.f32 0.0, %v1703
        %v1705 = vpop.f32.mrb[0].mxu0
        %v1706 = vpop.f32.mrb[0].mxu0
        %v1707 = vadd.f32 0.0, %v1706
        %v1708 = vpop.f32.mrb[0].mxu0
        %1709 = vmatprep.mubr.bf16.mxu0 0
        %1710 = vmatmul.mubr.bf16.gmra.mrb[0].mxu0 %v1534
        %v1711 = vpop.f32.mrb[0].mxu0
        %v1712 = vadd.f32 0.0, %v1711
        %v1713 = vpop.f32.mrb[0].mxu0
        %v1714 = vpop.f32.mrb[0].mxu0
        %v1715 = vadd.f32 0.0, %v1714
        %v1716 = vpop.f32.mrb[0].mxu0
        %1717 = vmatprep.mubr.bf16.mxu0 0
        %1718 = vmatmul.mubr.bf16.gmra.mrb[0].mxu0 %v1535
        %v1719 = vpop.f32.mrb[0].mxu0
        %v1720 = vadd.f32 0.0, %v1719
        %v1721 = vpop.f32.mrb[0].mxu0
        %v1722 = vpop.f32.mrb[0].mxu0
        %v1723 = vadd.f32 0.0, %v1722
        %v1724 = vpop.f32.mrb[0].mxu0
        %1725 = vmatprep.mubr.bf16.mxu0 0
        %1726 = vmatmul.mubr.bf16.gmra.mrb[0].mxu0 %v1536
        %v1727 = vpop.f32.mrb[0].mxu0
        %v1728 = vadd.f32 0.0, %v1727
        %v1729 = vpop.f32.mrb[0].mxu0
        %v1730 = vpop.f32.mrb[0].mxu0
        %v1731 = vadd.f32 0.0, %v1730
        %v1732 = vpop.f32.mrb[0].mxu0
        %1733 = vmatprep.mubr.bf16.mxu0 0
        %1734 = vmatmul.mubr.bf16.gmra.mrb[0].mxu0 %v1537
        %v1735 = vpop.f32.mrb[0].mxu0
        %v1736 = vadd.f32 0.0, %v1735
        %v1737 = vpop.f32.mrb[0].mxu0
        %v1738 = vpop.f32.mrb[0].mxu0
        %v1739 = vadd.f32 0.0, %v1738
        %v1740 = vpop.f32.mrb[0].mxu0
        %1741 = vmatprep.mubr.bf16.mxu0 0
        %1742 = vmatmul.mubr.bf16.gmra.mrb[0].mxu0 %v1538
        %v1743 = vpop.f32.mrb[0].mxu0
        %v1744 = vadd.f32 0.0, %v1743
        %v1745 = vpop.f32.mrb[0].mxu0
        %v1746 = vpop.f32.mrb[0].mxu0
        %v1747 = vadd.f32 0.0, %v1746
        %v1748 = vpop.f32.mrb[0].mxu0
        %1749 = vmatprep.mubr.bf16.mxu0 0
        %1750 = vmatmul.mubr.bf16.gmra.mrb[0].mxu0 %v1539
        %v1751 = vpop.f32.mrb[0].mxu0
        %v1752 = vadd.f32 0.0, %v1751
        %v1753 = vpop.f32.mrb[0].mxu0
        %v1754 = vpop.f32.mrb[0].mxu0
        %v1755 = vadd.f32 0.0, %v1754
        %v1756 = vpop.f32.mrb[0].mxu0
        %1757 = vmatprep.mubr.bf16.mxu0 0
        %1758 = vmatmul.mubr.bf16.gmra.mrb[0].mxu0 %v1540
        %v1759 = vpop.f32.mrb[0].mxu0
        %v1760 = vadd.f32 0.0, %v1759
        %v1761 = vpop.f32.mrb[0].mxu0
        %v1762 = vpop.f32.mrb[0].mxu0
        %v1763 = vadd.f32 0.0, %v1762
        %v1764 = vpop.f32.mrb[0].mxu0
        %1765 = vdwg.mxu0
        %v1766 = vld [vmem:[%s2] sm:$0xff]
        %v1767 = vld [vmem:[%s2 + $0x8] sm:$0xff]
        %v1768 = vld [vmem:[%s2 + $0x10] sm:$0xff]
        %v1769 = vld [vmem:[%s2 + $0x18] sm:$0xff]
        %v1770 = vld [vmem:[%s2 + $0x20] sm:$0xff]
        %v1771 = vld [vmem:[%s2 + $0x28] sm:$0xff]
        %v1772 = vld [vmem:[%s2 + $0x30] sm:$0xff]
        %v1773 = vld [vmem:[%s2 + $0x38] sm:$0xff]
        %v1774 = vld [vmem:[%s2 + $0x40] sm:$0xff]
        %v1775 = vld [vmem:[%s2 + $0x48] sm:$0xff]
        %v1776 = vld [vmem:[%s2 + $0x50] sm:$0xff]
        %v1777 = vld [vmem:[%s2 + $0x58] sm:$0xff]
        %v1778 = vld [vmem:[%s2 + $0x60] sm:$0xff]
        %v1779 = vld [vmem:[%s2 + $0x68] sm:$0xff]
        %v1780 = vld [vmem:[%s2 + $0x70] sm:$0xff]
        %v1781 = vld [vmem:[%s2 + $0x78] sm:$0xff]
        %v1782 = vld [vmem:[%s2 + $0x80] sm:$0xff]
        %v1783 = vld [vmem:[%s2 + $0x88] sm:$0xff]
        %v1784 = vld [vmem:[%s2 + $0x90] sm:$0xff]
        %v1785 = vld [vmem:[%s2 + $0x98] sm:$0xff]
        %v1786 = vld [vmem:[%s2 + $0xa0] sm:$0xff]
        %v1787 = vld [vmem:[%s2 + $0xa8] sm:$0xff]
        %v1788 = vld [vmem:[%s2 + $0xb0] sm:$0xff]
        %v1789 = vld [vmem:[%s2 + $0xb8] sm:$0xff]
        %v1790 = vld [vmem:[%s2 + $0xc0] sm:$0xff]
        %v1791 = vld [vmem:[%s2 + $0xc8] sm:$0xff]
        %v1792 = vld [vmem:[%s2 + $0xd0] sm:$0xff]
        %v1793 = vld [vmem:[%s2 + $0xd8] sm:$0xff]
        %v1794 = vld [vmem:[%s2 + $0xe0] sm:$0xff]
        %v1795 = vld [vmem:[%s2 + $0xe8] sm:$0xff]
        %v1796 = vld [vmem:[%s2 + $0xf0] sm:$0xff]
        %v1797 = vld [vmem:[%s2 + $0xf8] sm:$0xff]
        %v1798 = vadd.f32 %v1640, %v1766
        %v1799 = vadd.f32 %v1643, %v1767
        %v1800 = vadd.f32 %v1648, %v1768
        %v1801 = vadd.f32 %v1651, %v1769
        %v1802 = vadd.f32 %v1656, %v1770
        %v1803 = vadd.f32 %v1659, %v1771
        %v1804 = vadd.f32 %v1664, %v1772
        %v1805 = vadd.f32 %v1667, %v1773
        %v1806 = vadd.f32 %v1672, %v1774
        %v1807 = vadd.f32 %v1675, %v1775
        %v1808 = vadd.f32 %v1680, %v1776
        %v1809 = vadd.f32 %v1683, %v1777
        %v1810 = vadd.f32 %v1688, %v1778
        %v1811 = vadd.f32 %v1691, %v1779
        %v1812 = vadd.f32 %v1696, %v1780
        %v1813 = vadd.f32 %v1699, %v1781
        %v1814 = vadd.f32 %v1704, %v1782
        %v1815 = vadd.f32 %v1707, %v1783
        %v1816 = vadd.f32 %v1712, %v1784
        %v1817 = vadd.f32 %v1715, %v1785
        %v1818 = vadd.f32 %v1720, %v1786
        %v1819 = vadd.f32 %v1723, %v1787
        %v1820 = vadd.f32 %v1728, %v1788
        %v1821 = vadd.f32 %v1731, %v1789
        %v1822 = vadd.f32 %v1736, %v1790
        %v1823 = vadd.f32 %v1739, %v1791
        %v1824 = vadd.f32 %v1744, %v1792
        %v1825 = vadd.f32 %v1747, %v1793
        %v1826 = vadd.f32 %v1752, %v1794
        %v1827 = vadd.f32 %v1755, %v1795
        %v1828 = vadd.f32 %v1760, %v1796
        %v1829 = vadd.f32 %v1763, %v1797
        %v1830 = vmax.f32 %v1798, 0.0
        %v1831 = vmax.f32 %v1799, 0.0
        %v1832 = vmax.f32 %v1800, 0.0
        %v1833 = vmax.f32 %v1801, 0.0
        %v1834 = vmax.f32 %v1802, 0.0
        %v1835 = vmax.f32 %v1803, 0.0
        %v1836 = vmax.f32 %v1804, 0.0
        %v1837 = vmax.f32 %v1805, 0.0
        %v1838 = vmax.f32 %v1806, 0.0
        %v1839 = vmax.f32 %v1807, 0.0
        %v1840 = vmax.f32 %v1808, 0.0
        %v1841 = vmax.f32 %v1809, 0.0
        %v1842 = vmax.f32 %v1810, 0.0
        %v1843 = vmax.f32 %v1811, 0.0
        %v1844 = vmax.f32 %v1812, 0.0
        %v1845 = vmax.f32 %v1813, 0.0
        %v1846 = vmax.f32 %v1814, 0.0
        %v1847 = vmax.f32 %v1815, 0.0
        %v1848 = vmax.f32 %v1816, 0.0
        %v1849 = vmax.f32 %v1817, 0.0
        %v1850 = vmax.f32 %v1818, 0.0
        %v1851 = vmax.f32 %v1819, 0.0
        %v1852 = vmax.f32 %v1820, 0.0
        %v1853 = vmax.f32 %v1821, 0.0
        %v1854 = vmax.f32 %v1822, 0.0
        %v1855 = vmax.f32 %v1823, 0.0
        %v1856 = vmax.f32 %v1824, 0.0
        %v1857 = vmax.f32 %v1825, 0.0
        %v1858 = vmax.f32 %v1826, 0.0
        %v1859 = vmax.f32 %v1827, 0.0
        %v1860 = vmax.f32 %v1828, 0.0
        %v1861 = vmax.f32 %v1829, 0.0
        %1862 = vst [vmem:[%s163] sm:$0xff] %v1830
        %1863 = vst [vmem:[%s163 + $0x8] sm:$0xff] %v1831
        %1864 = vst [vmem:[%s163 + $0x10] sm:$0xff] %v1832
        %1865 = vst [vmem:[%s163 + $0x18] sm:$0xff] %v1833
        %1866 = vst [vmem:[%s163 + $0x20] sm:$0xff] %v1834
        %1867 = vst [vmem:[%s163 + $0x28] sm:$0xff] %v1835
        %1868 = vst [vmem:[%s163 + $0x30] sm:$0xff] %v1836
        %1869 = vst [vmem:[%s163 + $0x38] sm:$0xff] %v1837
        %1870 = vst [vmem:[%s163 + $0x40] sm:$0xff] %v1838
        %1871 = vst [vmem:[%s163 + $0x48] sm:$0xff] %v1839
        %1872 = vst [vmem:[%s163 + $0x50] sm:$0xff] %v1840
        %1873 = vst [vmem:[%s163 + $0x58] sm:$0xff] %v1841
        %1874 = vst [vmem:[%s163 + $0x60] sm:$0xff] %v1842
        %1875 = vst [vmem:[%s163 + $0x68] sm:$0xff] %v1843
        %1876 = vst [vmem:[%s163 + $0x70] sm:$0xff] %v1844
        %1877 = vst [vmem:[%s163 + $0x78] sm:$0xff] %v1845
        %1878 = vst [vmem:[%s163 + $0x80] sm:$0xff] %v1846
        %1879 = vst [vmem:[%s163 + $0x88] sm:$0xff] %v1847
        %1880 = vst [vmem:[%s163 + $0x90] sm:$0xff] %v1848
        %1881 = vst [vmem:[%s163 + $0x98] sm:$0xff] %v1849
        %1882 = vst [vmem:[%s163 + $0xa0] sm:$0xff] %v1850
        %1883 = vst [vmem:[%s163 + $0xa8] sm:$0xff] %v1851
        %1884 = vst [vmem:[%s163 + $0xb0] sm:$0xff] %v1852
        %1885 = vst [vmem:[%s163 + $0xb8] sm:$0xff] %v1853
        %1886 = vst [vmem:[%s163 + $0xc0] sm:$0xff] %v1854
        %1887 = vst [vmem:[%s163 + $0xc8] sm:$0xff] %v1855
        %1888 = vst [vmem:[%s163 + $0xd0] sm:$0xff] %v1856
        %1889 = vst [vmem:[%s163 + $0xd8] sm:$0xff] %v1857
        %1890 = vst [vmem:[%s163 + $0xe0] sm:$0xff] %v1858
        %1891 = vst [vmem:[%s163 + $0xe8] sm:$0xff] %v1859
        %1892 = vst [vmem:[%s163 + $0xf0] sm:$0xff] %v1860
        %1893 = vst [vmem:[%s163 + $0xf8] sm:$0xff] %v1861
        %s1894 = sand.u32 %s93, 1
        %s1895 = scalar_lea.sflag [#allocation3], %s1894
        %s1896 = sand.u32 %s93, 1
        %s1897 = smul.addr %s1896, 256
        %s1898 = scalar_lea.vmem [#allocation2], %s1897
        // Predicated region
        $region33: #{tpu_custom_call.1} parent=31 // pred_check
          %p1899 = pneg %p103
        $region34: #{tpu_custom_call.1} parent=31 // pred_check_branch
          %1901 = sbr.rel (%p1899) target = $region36
        $region35: #{tpu_custom_call.1} parent=31 // pred_region
          %s1903 = ssub.s32 4096, 4096
          %1904 = vsyncadd %s1895, %s1903
          %s1905 = smul.addr %s17, 32
          %s1906 = smul.addr %s1905, 128
          %s1907 = scalar_lea.hbm %s3, %s1906
          %s1908 = sshll.u32 %s1898, 4
          %s1909 = int_to_ptr.vmem [resolvable:$true] %s1908
          %1914 = dma.vmem_to_hbm [thread:$0]  %s1909, 4096, %s1907, %s1895, 128, 128, 8
        $region36: #{tpu_custom_call.1} parent=31 // pred_fallthru
          _
      $region32: #{tpu_custom_call.1} parent=5 // pred_fallthru
        _
      %p1915 = scmp.le.s32.totalorder 2, %s12
      // Predicated region
      $region37: #{tpu_custom_call.1} parent=5 // pred_check
        %p1916 = pneg %p1915
      $region38: #{tpu_custom_call.1} parent=5 // pred_check_branch
        %1918 = sbr.rel (%p1916) target = $region40
      $region39: #{tpu_custom_call.1} parent=5 // pred_region
        %s1919 = ssub.s32 %s12, 2
        // Predicated region
        $region41: #{tpu_custom_call.1} parent=39 // pred_check
          %p1920 = pneg %p109
        $region42: #{tpu_custom_call.1} parent=39 // pred_check_branch
          %1922 = sbr.rel (%p1920) target = $region44
        $region43: #{tpu_custom_call.1} parent=39 // pred_region
          %s1923 = sand.u32 %s94, 1
          %s1924 = scalar_lea.sflag [#allocation3], %s1923
          %s1925 = sand.u32 %s94, 1
          %s1926 = smul.addr %s1925, 256
          %s1927 = scalar_lea.vmem [#allocation2], %s1926
          %1928 = dma.done %s1924, 4096
        $region44: #{tpu_custom_call.1} parent=39 // pred_fallthru
          _
      $region40: #{tpu_custom_call.1} parent=5 // pred_fallthru
        _
    $region6: #{tpu_custom_call.1} parent=1 // loop_footer
      %s16 = sadd.s32 1, %s12
    $region7: #{tpu_custom_call.1} parent=1 // loop_footer_branch
      %11 = sbr.rel target = $region3
    $region8: #{tpu_custom_call.1} parent=1 // loop_exit
      _
    %1929 = vsyncpa [#allocation3], 1
    %s1930 = scalar_lea.sflag [#allocation3], 1
    %1931 = vsyncpa %s1930, 1

</llo_original>
